<compile_context>
chip_gen: v6e
topology: v6e:2x2x1
jax: 0.10.0
libtpu: 0.0.40
codegen_flags: <defaults>
</compile_context>

<pallas_src>
import functools

import jax
import jax.numpy as jnp
from jax.experimental import pallas as pl
from jax.experimental.pallas import tpu as pltpu


# ----------------------------------------------------------------------------
# Fused Pallas kernel: LSTM stack + (pooling | last-step) + FC
# ----------------------------------------------------------------------------
def _fused_forward_kernel(*refs, num_layers, T, B, H, pooling):
    # refs = [x2d, (wih_T_bf16, whh_T_bf16, bias) * num_layers, fcw_T, fcb, out]
    x_ref = refs[0]
    layer_refs = refs[1:1 + 3 * num_layers]
    fcw_ref = refs[1 + 3 * num_layers]
    fcb_ref = refs[2 + 3 * num_layers]
    out_ref = refs[3 + 3 * num_layers]

    cur = x_ref[...]                                   # (T*B, D_layer) f32
    h = None
    s1 = s2 = None
    for layer in range(num_layers):
        wih = layer_refs[3 * layer][...]               # (D_l, 4H) bf16
        whh = layer_refs[3 * layer + 1][...]           # (H, 4H)   bf16
        b = layer_refs[3 * layer + 2][...]             # (1, 4H)   f32 (b_ih+b_hh)

        # Hoisted input projection for all timesteps: one bf16 MXU matmul.
        gx = jnp.dot(cur.astype(jnp.bfloat16), wih,
                     preferred_element_type=jnp.float32) + b   # (T*B, 4H) f32

        h = jnp.zeros((B, H), jnp.float32)
        c = jnp.zeros((B, H), jnp.float32)
        last = layer == num_layers - 1
        hs = []                                        # only for non-last layers
        if last and pooling:
            s1 = jnp.zeros((B, H), jnp.float32)        # running sum(h)
            s2 = jnp.zeros((B, H), jnp.float32)        # running sum(h*h)

        for t in range(T):                             # fully unrolled (T static)
            gates = gx[t * B:(t + 1) * B, :] + jnp.dot(
                h.astype(jnp.bfloat16), whh,
                preferred_element_type=jnp.float32)    # (B, 4H) f32
            sg = jax.nn.sigmoid(gates)                 # one full-tile EUP pass
            i_g = sg[:, 0:H]
            f_g = sg[:, H:2 * H]
            o_g = sg[:, 3 * H:4 * H]
            g_g = jnp.tanh(gates[:, 2 * H:3 * H])
            c = f_g * c + i_g * g_g
            h = o_g * jnp.tanh(c)
            if not last:
                hs.append(h)                           # stays in vregs
            elif pooling:
                s1 = s1 + h
                s2 = s2 + h * h

        if not last:
            cur = jnp.concatenate(hs, axis=0)          # (T*B, H), once per layer

    if pooling:
        eps = 1e-9
        mean = s1 * (1.0 / T)                          # (B, H)
        # sum_t (h_t - mean + eps)^2 == sum(h^2) - T*mean^2 + T*eps^2
        # (cross term vanishes exactly); clamp guards f32 cancellation.
        k = jnp.maximum(s2 - s1 * mean + (T * eps * eps), 0.0)
        std = jnp.sqrt(k)
        fcw = fcw_ref[...]                             # (2H, C) f32
        # concat([mean, std]) @ fcw  ==  mean @ fcw[:H] + std @ fcw[H:]
        out = (jnp.dot(mean, fcw[0:H, :], preferred_element_type=jnp.float32)
               + jnp.dot(std, fcw[H:2 * H, :], preferred_element_type=jnp.float32)
               + fcb_ref[...])
    else:
        out = (jnp.dot(h, fcw_ref[...], preferred_element_type=jnp.float32)
               + fcb_ref[...])

    out_ref[...] = out


# ----------------------------------------------------------------------------
# Wrapper
# ----------------------------------------------------------------------------
def _full_spec(shape):
    nd = len(shape)
    return pl.BlockSpec(shape, lambda i, _nd=nd: (0,) * _nd)


def early_fusion_lstm_forward(x, lstm_params, fc_w, fc_b, statistic_pooling=False):
    """x: (B, T, D_in) batch_first, like the PyTorch module."""
    B, T, D_in = x.shape
    H = lstm_params[0][1].shape[1]                     # weight_hh_l0: (4H, H)
    C = fc_w.shape[0]

    # Time-major and flattened 2-D: row t*B + b corresponds to (t, b).
    x2d = jnp.swapaxes(x, 0, 1).reshape(T * B, D_in)

    inputs = [x2d]
    for (w_ih, w_hh, b_ih, b_hh) in lstm_params:
        inputs.append(jnp.transpose(w_ih).astype(jnp.bfloat16))   # (D_l, 4H)
        inputs.append(jnp.transpose(w_hh).astype(jnp.bfloat16))   # (H, 4H)
        inputs.append((b_ih + b_hh).reshape(1, 4 * H))            # fused bias, f32
    inputs.append(jnp.transpose(fc_w))                 # (F, C) f32
    inputs.append(fc_b.reshape(1, C))

    kernel = functools.partial(
        _fused_forward_kernel, num_layers=len(lstm_params),
        T=T, B=B, H=H, pooling=statistic_pooling)

    return pl.pallas_call(
        kernel,
        out_shape=jax.ShapeDtypeStruct((B, C), jnp.float32),
        grid_spec=pltpu.PrefetchScalarGridSpec(
            num_scalar_prefetch=0,
            grid=(1,),
            in_specs=[_full_spec(a.shape) for a in inputs],
            out_specs=_full_spec((B, C)),
        ),
        compiler_params=pltpu.CompilerParams(
            dimension_semantics=("arbitrary",)),
    )(*inputs)


# ----------------------------------------------------------------------------
# Pure-JAX reference (module semantics, f32)
# ----------------------------------------------------------------------------
def _lstm_ref(x, lstm_params):
    h_seq = x  # (B, T, D)
    for (w_ih, w_hh, b_ih, b_hh) in lstm_params:
        B = h_seq.shape[0]
        H = w_hh.shape[1]

        def step(carry, x_t):
            h, c = carry
            gates = x_t @ w_ih.T + h @ w_hh.T + b_ih + b_hh
            i, f, g, o = jnp.split(gates, 4, axis=-1)
            i, f, o = jax.nn.sigmoid(i), jax.nn.sigmoid(f), jax.nn.sigmoid(o)
            g = jnp.tanh(g)
            c = f * c + i * g
            h = o * jnp.tanh(c)
            return (h, c), h

        init = (jnp.zeros((B, H), jnp.float32), jnp.zeros((B, H), jnp.float32))
        _, hs = jax.lax.scan(step, init, jnp.swapaxes(h_seq, 0, 1))
        h_seq = jnp.swapaxes(hs, 0, 1)
    return h_seq


def _forward_ref(x, lstm_params, fc_w, fc_b, statistic_pooling=False):
    r_out = _lstm_ref(x, lstm_params)
    if statistic_pooling:
        mean = jnp.mean(r_out, axis=1, keepdims=True)
        k = jnp.sum((r_out - mean + 1e-09) ** 2, axis=1)
        std = jnp.sqrt(k)
        feature = jnp.concatenate([jnp.squeeze(mean), std], axis=1)
    else:
        feature = r_out[:, -1, :]
    return feature @ fc_w.T + fc_b


# ----------------------------------------------------------------------------
# Main
# ----------------------------------------------------------------------------
if __name__ == "__main__":
    # cfg: FUSION_HEAD.FEATURE_DIMS=16, MODALITY.NUMS=2, LSTM.DIM_HIDDEN=32,
    #      LSTM.NUM_LAYERS=2, MODEL.NUM_CLASSES=4
    B, T = 2, 8
    D_IN = 16 * 2
    H = 32
    NUM_LAYERS = 2
    NUM_CLASSES = 4

    key = jax.random.PRNGKey(0)

    def uniform(k, shape, bound):
        return jax.random.uniform(k, shape, jnp.float32, -bound, bound)

    lstm_params = []
    bound = 1.0 / jnp.sqrt(H)
    for layer in range(NUM_LAYERS):
        d = D_IN if layer == 0 else H
        key, k1, k2, k3, k4 = jax.random.split(key, 5)
        lstm_params.append((
            uniform(k1, (4 * H, d), bound),   # weight_ih_l{layer}
            uniform(k2, (4 * H, H), bound),   # weight_hh_l{layer}
            uniform(k3, (4 * H,), bound),     # bias_ih_l{layer}
            uniform(k4, (4 * H,), bound),     # bias_hh_l{layer}
        ))

    key, kfw, kfb, kx = jax.random.split(key, 4)
    fc_in = H                                  # statistic_pooling=False (module default)
    fc_bound = 1.0 / jnp.sqrt(fc_in)
    fc_w = uniform(kfw, (NUM_CLASSES, fc_in), fc_bound)
    fc_b = uniform(kfb, (NUM_CLASSES,), fc_bound)

    # stat-pooling head (2H -> C) for the alternate branch
    key, kgw, kgb = jax.random.split(key, 3)
    fc2_w = uniform(kgw, (NUM_CLASSES, 2 * H), 1.0 / jnp.sqrt(2 * H))
    fc2_b = uniform(kgb, (NUM_CLASSES,), 1.0 / jnp.sqrt(2 * H))

    x = jax.random.normal(kx, (B, T, D_IN), jnp.float32)

    # Tolerance: LSTM matmul operands are bf16 on the MXU (f32 accumulation),
    # so the kernel deviates from the pure-f32 reference at the ~1e-3 level;
    # 2e-2 gives comfortable headroom while still catching real bugs.
    ATOL = RTOL = 2e-2

    # default path: last-timestep feature + FC
    out = early_fusion_lstm_forward(x, lstm_params, fc_w, fc_b,
                                    statistic_pooling=False)
    out = jax.block_until_ready(out)
    ref = _forward_ref(x, lstm_params, fc_w, fc_b, statistic_pooling=False)
    assert out.shape == (B, NUM_CLASSES)
    assert jnp.allclose(out, ref, atol=ATOL, rtol=RTOL), (out, ref)

    # statistic_pooling path
    out_sp = early_fusion_lstm_forward(x, lstm_params, fc2_w, fc2_b,
                                       statistic_pooling=True)
    out_sp = jax.block_until_ready(out_sp)
    ref_sp = _forward_ref(x, lstm_params, fc2_w, fc2_b, statistic_pooling=True)
    assert out_sp.shape == (B, NUM_CLASSES)
    assert jnp.allclose(out_sp, ref_sp, atol=ATOL, rtol=RTOL), (out_sp, ref_sp)

    print("KERNEL_OK")
</pallas_src>

<mosaic_0001>
module attributes {stable_mosaic.version = 11 : i64} {
  func.func @_fused_forward_kernel(%arg0: i32, %arg1: memref<16x32xf32, #tpu.memory_space<vmem>>, %arg2: memref<32x128xbf16, #tpu.memory_space<vmem>>, %arg3: memref<32x128xbf16, #tpu.memory_space<vmem>>, %arg4: memref<1x128xf32, #tpu.memory_space<vmem>>, %arg5: memref<32x128xbf16, #tpu.memory_space<vmem>>, %arg6: memref<32x128xbf16, #tpu.memory_space<vmem>>, %arg7: memref<1x128xf32, #tpu.memory_space<vmem>>, %arg8: memref<32x4xf32, #tpu.memory_space<vmem>>, %arg9: memref<1x4xf32, #tpu.memory_space<vmem>>, %arg10: memref<2x4xf32, #tpu.memory_space<vmem>>) attributes {dimension_semantics = [#tpu.dimension_semantics<arbitrary>], iteration_bounds = array<i64: 1>, scalar_prefetch = 0 : i64, scratch_operands = 0 : i64, tpu.core_type = #tpu.core_type<tc>, window_params = [{pipeline_mode = #tpu.pipeline_mode<synchronous>, transform_indices = @transform_0, window_bounds = array<i64: 16, 32>}, {pipeline_mode = #tpu.pipeline_mode<synchronous>, transform_indices = @transform_1, window_bounds = array<i64: 32, 128>}, {pipeline_mode = #tpu.pipeline_mode<synchronous>, transform_indices = @transform_2, window_bounds = array<i64: 32, 128>}, {pipeline_mode = #tpu.pipeline_mode<synchronous>, transform_indices = @transform_3, window_bounds = array<i64: 1, 128>}, {pipeline_mode = #tpu.pipeline_mode<synchronous>, transform_indices = @transform_4, window_bounds = array<i64: 32, 128>}, {pipeline_mode = #tpu.pipeline_mode<synchronous>, transform_indices = @transform_5, window_bounds = array<i64: 32, 128>}, {pipeline_mode = #tpu.pipeline_mode<synchronous>, transform_indices = @transform_6, window_bounds = array<i64: 1, 128>}, {pipeline_mode = #tpu.pipeline_mode<synchronous>, transform_indices = @transform_7, window_bounds = array<i64: 32, 4>}, {pipeline_mode = #tpu.pipeline_mode<synchronous>, transform_indices = @transform_8, window_bounds = array<i64: 1, 4>}, {pipeline_mode = #tpu.pipeline_mode<synchronous>, transform_indices = @transform_9, window_bounds = array<i64: 2, 4>}]} {
    %c0 = arith.constant 0 : index
    %c0_0 = arith.constant 0 : index
    %0 = vector.load %arg1[%c0, %c0_0] : memref<16x32xf32, #tpu.memory_space<vmem>>, vector<16x32xf32>
    %c0_1 = arith.constant 0 : index
    %c0_2 = arith.constant 0 : index
    %1 = vector.load %arg2[%c0_1, %c0_2] : memref<32x128xbf16, #tpu.memory_space<vmem>>, vector<32x128xbf16>
    %c0_3 = arith.constant 0 : index
    %c0_4 = arith.constant 0 : index
    %2 = vector.load %arg3[%c0_3, %c0_4] : memref<32x128xbf16, #tpu.memory_space<vmem>>, vector<32x128xbf16>
    %c0_5 = arith.constant 0 : index
    %c0_6 = arith.constant 0 : index
    %3 = vector.load %arg4[%c0_5, %c0_6] : memref<1x128xf32, #tpu.memory_space<vmem>>, vector<1x128xf32>
    %4 = arith.truncf %0 : vector<16x32xf32> to vector<16x32xbf16>
    %cst = arith.constant dense<0.000000e+00> : vector<16x128xf32>
    %5 = tpu.matmul %4, %1, %cst {dimension_numbers = #tpu.dot_dimension_numbers<[1], [0], [0], [1], [0, 0, 1, 1], [], []>} : vector<16x32xbf16>, vector<32x128xbf16>, vector<16x128xf32> -> vector<16x128xf32>
    %6 = vector.broadcast %3 : vector<1x128xf32> to vector<16x128xf32>
    %7 = arith.addf %5, %6 : vector<16x128xf32>
    %cst_7 = arith.constant 0.000000e+00 : f32
    %8 = vector.broadcast %cst_7 : f32 to vector<2x32xf32>
    %cst_8 = arith.constant 0.000000e+00 : f32
    %9 = vector.broadcast %cst_8 : f32 to vector<2x32xf32>
    %10 = vector.extract_strided_slice %7 {offsets = [0, 0], sizes = [2, 128], strides = [1, 1]} : vector<16x128xf32> to vector<2x128xf32>
    %11 = arith.truncf %8 : vector<2x32xf32> to vector<2x32xbf16>
    %cst_9 = arith.constant dense<0.000000e+00> : vector<2x128xf32>
    %12 = tpu.matmul %11, %2, %cst_9 {dimension_numbers = #tpu.dot_dimension_numbers<[1], [0], [0], [1], [0, 0, 1, 1], [], []>} : vector<2x32xbf16>, vector<32x128xbf16>, vector<2x128xf32> -> vector<2x128xf32>
    %13 = arith.addf %10, %12 : vector<2x128xf32>
    %14 = arith.negf %13 : vector<2x128xf32>
    %15 = math.exp %14 : vector<2x128xf32>
    %cst_10 = arith.constant 1.000000e+00 : f32
    %16 = vector.broadcast %cst_10 : f32 to vector<2x128xf32>
    %17 = arith.addf %16, %15 : vector<2x128xf32>
    %18 = arith.divf %16, %17 : vector<2x128xf32>
    %19 = vector.extract_strided_slice %18 {offsets = [0, 0], sizes = [2, 32], strides = [1, 1]} : vector<2x128xf32> to vector<2x32xf32>
    %20 = vector.extract_strided_slice %18 {offsets = [0, 32], sizes = [2, 32], strides = [1, 1]} : vector<2x128xf32> to vector<2x32xf32>
    %21 = vector.extract_strided_slice %18 {offsets = [0, 96], sizes = [2, 32], strides = [1, 1]} : vector<2x128xf32> to vector<2x32xf32>
    %22 = vector.extract_strided_slice %13 {offsets = [0, 64], sizes = [2, 32], strides = [1, 1]} : vector<2x128xf32> to vector<2x32xf32>
    %23 = math.tanh %22 : vector<2x32xf32>
    %24 = arith.mulf %20, %9 : vector<2x32xf32>
    %25 = arith.mulf %19, %23 : vector<2x32xf32>
    %26 = arith.addf %24, %25 : vector<2x32xf32>
    %27 = math.tanh %26 : vector<2x32xf32>
    %28 = arith.mulf %21, %27 : vector<2x32xf32>
    %29 = vector.extract_strided_slice %7 {offsets = [2, 0], sizes = [2, 128], strides = [1, 1]} : vector<16x128xf32> to vector<2x128xf32>
    %30 = arith.truncf %28 : vector<2x32xf32> to vector<2x32xbf16>
    %cst_11 = arith.constant dense<0.000000e+00> : vector<2x128xf32>
    %31 = tpu.matmul %30, %2, %cst_11 {dimension_numbers = #tpu.dot_dimension_numbers<[1], [0], [0], [1], [0, 0, 1, 1], [], []>} : vector<2x32xbf16>, vector<32x128xbf16>, vector<2x128xf32> -> vector<2x128xf32>
    %32 = arith.addf %29, %31 : vector<2x128xf32>
    %33 = arith.negf %32 : vector<2x128xf32>
    %34 = math.exp %33 : vector<2x128xf32>
    %cst_12 = arith.constant 1.000000e+00 : f32
    %35 = vector.broadcast %cst_12 : f32 to vector<2x128xf32>
    %36 = arith.addf %35, %34 : vector<2x128xf32>
    %37 = arith.divf %35, %36 : vector<2x128xf32>
    %38 = vector.extract_strided_slice %37 {offsets = [0, 0], sizes = [2, 32], strides = [1, 1]} : vector<2x128xf32> to vector<2x32xf32>
    %39 = vector.extract_strided_slice %37 {offsets = [0, 32], sizes = [2, 32], strides = [1, 1]} : vector<2x128xf32> to vector<2x32xf32>
    %40 = vector.extract_strided_slice %37 {offsets = [0, 96], sizes = [2, 32], strides = [1, 1]} : vector<2x128xf32> to vector<2x32xf32>
    %41 = vector.extract_strided_slice %32 {offsets = [0, 64], sizes = [2, 32], strides = [1, 1]} : vector<2x128xf32> to vector<2x32xf32>
    %42 = math.tanh %41 : vector<2x32xf32>
    %43 = arith.mulf %39, %26 : vector<2x32xf32>
    %44 = arith.mulf %38, %42 : vector<2x32xf32>
    %45 = arith.addf %43, %44 : vector<2x32xf32>
    %46 = math.tanh %45 : vector<2x32xf32>
    %47 = arith.mulf %40, %46 : vector<2x32xf32>
    %48 = vector.extract_strided_slice %7 {offsets = [4, 0], sizes = [2, 128], strides = [1, 1]} : vector<16x128xf32> to vector<2x128xf32>
    %49 = arith.truncf %47 : vector<2x32xf32> to vector<2x32xbf16>
    %cst_13 = arith.constant dense<0.000000e+00> : vector<2x128xf32>
    %50 = tpu.matmul %49, %2, %cst_13 {dimension_numbers = #tpu.dot_dimension_numbers<[1], [0], [0], [1], [0, 0, 1, 1], [], []>} : vector<2x32xbf16>, vector<32x128xbf16>, vector<2x128xf32> -> vector<2x128xf32>
    %51 = arith.addf %48, %50 : vector<2x128xf32>
    %52 = arith.negf %51 : vector<2x128xf32>
    %53 = math.exp %52 : vector<2x128xf32>
    %cst_14 = arith.constant 1.000000e+00 : f32
    %54 = vector.broadcast %cst_14 : f32 to vector<2x128xf32>
    %55 = arith.addf %54, %53 : vector<2x128xf32>
    %56 = arith.divf %54, %55 : vector<2x128xf32>
    %57 = vector.extract_strided_slice %56 {offsets = [0, 0], sizes = [2, 32], strides = [1, 1]} : vector<2x128xf32> to vector<2x32xf32>
    %58 = vector.extract_strided_slice %56 {offsets = [0, 32], sizes = [2, 32], strides = [1, 1]} : vector<2x128xf32> to vector<2x32xf32>
    %59 = vector.extract_strided_slice %56 {offsets = [0, 96], sizes = [2, 32], strides = [1, 1]} : vector<2x128xf32> to vector<2x32xf32>
    %60 = vector.extract_strided_slice %51 {offsets = [0, 64], sizes = [2, 32], strides = [1, 1]} : vector<2x128xf32> to vector<2x32xf32>
    %61 = math.tanh %60 : vector<2x32xf32>
    %62 = arith.mulf %58, %45 : vector<2x32xf32>
    %63 = arith.mulf %57, %61 : vector<2x32xf32>
    %64 = arith.addf %62, %63 : vector<2x32xf32>
    %65 = math.tanh %64 : vector<2x32xf32>
    %66 = arith.mulf %59, %65 : vector<2x32xf32>
    %67 = vector.extract_strided_slice %7 {offsets = [6, 0], sizes = [2, 128], strides = [1, 1]} : vector<16x128xf32> to vector<2x128xf32>
    %68 = arith.truncf %66 : vector<2x32xf32> to vector<2x32xbf16>
    %cst_15 = arith.constant dense<0.000000e+00> : vector<2x128xf32>
    %69 = tpu.matmul %68, %2, %cst_15 {dimension_numbers = #tpu.dot_dimension_numbers<[1], [0], [0], [1], [0, 0, 1, 1], [], []>} : vector<2x32xbf16>, vector<32x128xbf16>, vector<2x128xf32> -> vector<2x128xf32>
    %70 = arith.addf %67, %69 : vector<2x128xf32>
    %71 = arith.negf %70 : vector<2x128xf32>
    %72 = math.exp %71 : vector<2x128xf32>
    %cst_16 = arith.constant 1.000000e+00 : f32
    %73 = vector.broadcast %cst_16 : f32 to vector<2x128xf32>
    %74 = arith.addf %73, %72 : vector<2x128xf32>
    %75 = arith.divf %73, %74 : vector<2x128xf32>
    %76 = vector.extract_strided_slice %75 {offsets = [0, 0], sizes = [2, 32], strides = [1, 1]} : vector<2x128xf32> to vector<2x32xf32>
    %77 = vector.extract_strided_slice %75 {offsets = [0, 32], sizes = [2, 32], strides = [1, 1]} : vector<2x128xf32> to vector<2x32xf32>
    %78 = vector.extract_strided_slice %75 {offsets = [0, 96], sizes = [2, 32], strides = [1, 1]} : vector<2x128xf32> to vector<2x32xf32>
    %79 = vector.extract_strided_slice %70 {offsets = [0, 64], sizes = [2, 32], strides = [1, 1]} : vector<2x128xf32> to vector<2x32xf32>
    %80 = math.tanh %79 : vector<2x32xf32>
    %81 = arith.mulf %77, %64 : vector<2x32xf32>
    %82 = arith.mulf %76, %80 : vector<2x32xf32>
    %83 = arith.addf %81, %82 : vector<2x32xf32>
    %84 = math.tanh %83 : vector<2x32xf32>
    %85 = arith.mulf %78, %84 : vector<2x32xf32>
    %86 = vector.extract_strided_slice %7 {offsets = [8, 0], sizes = [2, 128], strides = [1, 1]} : vector<16x128xf32> to vector<2x128xf32>
    %87 = arith.truncf %85 : vector<2x32xf32> to vector<2x32xbf16>
    %cst_17 = arith.constant dense<0.000000e+00> : vector<2x128xf32>
    %88 = tpu.matmul %87, %2, %cst_17 {dimension_numbers = #tpu.dot_dimension_numbers<[1], [0], [0], [1], [0, 0, 1, 1], [], []>} : vector<2x32xbf16>, vector<32x128xbf16>, vector<2x128xf32> -> vector<2x128xf32>
    %89 = arith.addf %86, %88 : vector<2x128xf32>
    %90 = arith.negf %89 : vector<2x128xf32>
    %91 = math.exp %90 : vector<2x128xf32>
    %cst_18 = arith.constant 1.000000e+00 : f32
    %92 = vector.broadcast %cst_18 : f32 to vector<2x128xf32>
    %93 = arith.addf %92, %91 : vector<2x128xf32>
    %94 = arith.divf %92, %93 : vector<2x128xf32>
    %95 = vector.extract_strided_slice %94 {offsets = [0, 0], sizes = [2, 32], strides = [1, 1]} : vector<2x128xf32> to vector<2x32xf32>
    %96 = vector.extract_strided_slice %94 {offsets = [0, 32], sizes = [2, 32], strides = [1, 1]} : vector<2x128xf32> to vector<2x32xf32>
    %97 = vector.extract_strided_slice %94 {offsets = [0, 96], sizes = [2, 32], strides = [1, 1]} : vector<2x128xf32> to vector<2x32xf32>
    %98 = vector.extract_strided_slice %89 {offsets = [0, 64], sizes = [2, 32], strides = [1, 1]} : vector<2x128xf32> to vector<2x32xf32>
    %99 = math.tanh %98 : vector<2x32xf32>
    %100 = arith.mulf %96, %83 : vector<2x32xf32>
    %101 = arith.mulf %95, %99 : vector<2x32xf32>
    %102 = arith.addf %100, %101 : vector<2x32xf32>
    %103 = math.tanh %102 : vector<2x32xf32>
    %104 = arith.mulf %97, %103 : vector<2x32xf32>
    %105 = vector.extract_strided_slice %7 {offsets = [10, 0], sizes = [2, 128], strides = [1, 1]} : vector<16x128xf32> to vector<2x128xf32>
    %106 = arith.truncf %104 : vector<2x32xf32> to vector<2x32xbf16>
    %cst_19 = arith.constant dense<0.000000e+00> : vector<2x128xf32>
    %107 = tpu.matmul %106, %2, %cst_19 {dimension_numbers = #tpu.dot_dimension_numbers<[1], [0], [0], [1], [0, 0, 1, 1], [], []>} : vector<2x32xbf16>, vector<32x128xbf16>, vector<2x128xf32> -> vector<2x128xf32>
    %108 = arith.addf %105, %107 : vector<2x128xf32>
    %109 = arith.negf %108 : vector<2x128xf32>
    %110 = math.exp %109 : vector<2x128xf32>
    %cst_20 = arith.constant 1.000000e+00 : f32
    %111 = vector.broadcast %cst_20 : f32 to vector<2x128xf32>
    %112 = arith.addf %111, %110 : vector<2x128xf32>
    %113 = arith.divf %111, %112 : vector<2x128xf32>
    %114 = vector.extract_strided_slice %113 {offsets = [0, 0], sizes = [2, 32], strides = [1, 1]} : vector<2x128xf32> to vector<2x32xf32>
    %115 = vector.extract_strided_slice %113 {offsets = [0, 32], sizes = [2, 32], strides = [1, 1]} : vector<2x128xf32> to vector<2x32xf32>
    %116 = vector.extract_strided_slice %113 {offsets = [0, 96], sizes = [2, 32], strides = [1, 1]} : vector<2x128xf32> to vector<2x32xf32>
    %117 = vector.extract_strided_slice %108 {offsets = [0, 64], sizes = [2, 32], strides = [1, 1]} : vector<2x128xf32> to vector<2x32xf32>
    %118 = math.tanh %117 : vector<2x32xf32>
    %119 = arith.mulf %115, %102 : vector<2x32xf32>
    %120 = arith.mulf %114, %118 : vector<2x32xf32>
    %121 = arith.addf %119, %120 : vector<2x32xf32>
    %122 = math.tanh %121 : vector<2x32xf32>
    %123 = arith.mulf %116, %122 : vector<2x32xf32>
    %124 = vector.extract_strided_slice %7 {offsets = [12, 0], sizes = [2, 128], strides = [1, 1]} : vector<16x128xf32> to vector<2x128xf32>
    %125 = arith.truncf %123 : vector<2x32xf32> to vector<2x32xbf16>
    %cst_21 = arith.constant dense<0.000000e+00> : vector<2x128xf32>
    %126 = tpu.matmul %125, %2, %cst_21 {dimension_numbers = #tpu.dot_dimension_numbers<[1], [0], [0], [1], [0, 0, 1, 1], [], []>} : vector<2x32xbf16>, vector<32x128xbf16>, vector<2x128xf32> -> vector<2x128xf32>
    %127 = arith.addf %124, %126 : vector<2x128xf32>
    %128 = arith.negf %127 : vector<2x128xf32>
    %129 = math.exp %128 : vector<2x128xf32>
    %cst_22 = arith.constant 1.000000e+00 : f32
    %130 = vector.broadcast %cst_22 : f32 to vector<2x128xf32>
    %131 = arith.addf %130, %129 : vector<2x128xf32>
    %132 = arith.divf %130, %131 : vector<2x128xf32>
    %133 = vector.extract_strided_slice %132 {offsets = [0, 0], sizes = [2, 32], strides = [1, 1]} : vector<2x128xf32> to vector<2x32xf32>
    %134 = vector.extract_strided_slice %132 {offsets = [0, 32], sizes = [2, 32], strides = [1, 1]} : vector<2x128xf32> to vector<2x32xf32>
    %135 = vector.extract_strided_slice %132 {offsets = [0, 96], sizes = [2, 32], strides = [1, 1]} : vector<2x128xf32> to vector<2x32xf32>
    %136 = vector.extract_strided_slice %127 {offsets = [0, 64], sizes = [2, 32], strides = [1, 1]} : vector<2x128xf32> to vector<2x32xf32>
    %137 = math.tanh %136 : vector<2x32xf32>
    %138 = arith.mulf %134, %121 : vector<2x32xf32>
    %139 = arith.mulf %133, %137 : vector<2x32xf32>
    %140 = arith.addf %138, %139 : vector<2x32xf32>
    %141 = math.tanh %140 : vector<2x32xf32>
    %142 = arith.mulf %135, %141 : vector<2x32xf32>
    %143 = vector.extract_strided_slice %7 {offsets = [14, 0], sizes = [2, 128], strides = [1, 1]} : vector<16x128xf32> to vector<2x128xf32>
    %144 = arith.truncf %142 : vector<2x32xf32> to vector<2x32xbf16>
    %cst_23 = arith.constant dense<0.000000e+00> : vector<2x128xf32>
    %145 = tpu.matmul %144, %2, %cst_23 {dimension_numbers = #tpu.dot_dimension_numbers<[1], [0], [0], [1], [0, 0, 1, 1], [], []>} : vector<2x32xbf16>, vector<32x128xbf16>, vector<2x128xf32> -> vector<2x128xf32>
    %146 = arith.addf %143, %145 : vector<2x128xf32>
    %147 = arith.negf %146 : vector<2x128xf32>
    %148 = math.exp %147 : vector<2x128xf32>
    %cst_24 = arith.constant 1.000000e+00 : f32
    %149 = vector.broadcast %cst_24 : f32 to vector<2x128xf32>
    %150 = arith.addf %149, %148 : vector<2x128xf32>
    %151 = arith.divf %149, %150 : vector<2x128xf32>
    %152 = vector.extract_strided_slice %151 {offsets = [0, 0], sizes = [2, 32], strides = [1, 1]} : vector<2x128xf32> to vector<2x32xf32>
    %153 = vector.extract_strided_slice %151 {offsets = [0, 32], sizes = [2, 32], strides = [1, 1]} : vector<2x128xf32> to vector<2x32xf32>
    %154 = vector.extract_strided_slice %151 {offsets = [0, 96], sizes = [2, 32], strides = [1, 1]} : vector<2x128xf32> to vector<2x32xf32>
    %155 = vector.extract_strided_slice %146 {offsets = [0, 64], sizes = [2, 32], strides = [1, 1]} : vector<2x128xf32> to vector<2x32xf32>
    %156 = math.tanh %155 : vector<2x32xf32>
    %157 = arith.mulf %153, %140 : vector<2x32xf32>
    %158 = arith.mulf %152, %156 : vector<2x32xf32>
    %159 = arith.addf %157, %158 : vector<2x32xf32>
    %160 = math.tanh %159 : vector<2x32xf32>
    %161 = arith.mulf %154, %160 : vector<2x32xf32>
    %162 = tpu.concatenate %28, %47, %66, %85, %104, %123, %142, %161 in 0 : vector<2x32xf32>, vector<2x32xf32>, vector<2x32xf32>, vector<2x32xf32>, vector<2x32xf32>, vector<2x32xf32>, vector<2x32xf32>, vector<2x32xf32> -> vector<16x32xf32>
    %c0_25 = arith.constant 0 : index
    %c0_26 = arith.constant 0 : index
    %163 = vector.load %arg5[%c0_25, %c0_26] : memref<32x128xbf16, #tpu.memory_space<vmem>>, vector<32x128xbf16>
    %c0_27 = arith.constant 0 : index
    %c0_28 = arith.constant 0 : index
    %164 = vector.load %arg6[%c0_27, %c0_28] : memref<32x128xbf16, #tpu.memory_space<vmem>>, vector<32x128xbf16>
    %c0_29 = arith.constant 0 : index
    %c0_30 = arith.constant 0 : index
    %165 = vector.load %arg7[%c0_29, %c0_30] : memref<1x128xf32, #tpu.memory_space<vmem>>, vector<1x128xf32>
    %166 = arith.truncf %162 : vector<16x32xf32> to vector<16x32xbf16>
    %cst_31 = arith.constant dense<0.000000e+00> : vector<16x128xf32>
    %167 = tpu.matmul %166, %163, %cst_31 {dimension_numbers = #tpu.dot_dimension_numbers<[1], [0], [0], [1], [0, 0, 1, 1], [], []>} : vector<16x32xbf16>, vector<32x128xbf16>, vector<16x128xf32> -> vector<16x128xf32>
    %168 = vector.broadcast %165 : vector<1x128xf32> to vector<16x128xf32>
    %169 = arith.addf %167, %168 : vector<16x128xf32>
    %cst_32 = arith.constant 0.000000e+00 : f32
    %170 = vector.broadcast %cst_32 : f32 to vector<2x32xf32>
    %cst_33 = arith.constant 0.000000e+00 : f32
    %171 = vector.broadcast %cst_33 : f32 to vector<2x32xf32>
    %172 = vector.extract_strided_slice %169 {offsets = [0, 0], sizes = [2, 128], strides = [1, 1]} : vector<16x128xf32> to vector<2x128xf32>
    %173 = arith.truncf %170 : vector<2x32xf32> to vector<2x32xbf16>
    %cst_34 = arith.constant dense<0.000000e+00> : vector<2x128xf32>
    %174 = tpu.matmul %173, %164, %cst_34 {dimension_numbers = #tpu.dot_dimension_numbers<[1], [0], [0], [1], [0, 0, 1, 1], [], []>} : vector<2x32xbf16>, vector<32x128xbf16>, vector<2x128xf32> -> vector<2x128xf32>
    %175 = arith.addf %172, %174 : vector<2x128xf32>
    %176 = arith.negf %175 : vector<2x128xf32>
    %177 = math.exp %176 : vector<2x128xf32>
    %cst_35 = arith.constant 1.000000e+00 : f32
    %178 = vector.broadcast %cst_35 : f32 to vector<2x128xf32>
    %179 = arith.addf %178, %177 : vector<2x128xf32>
    %180 = arith.divf %178, %179 : vector<2x128xf32>
    %181 = vector.extract_strided_slice %180 {offsets = [0, 0], sizes = [2, 32], strides = [1, 1]} : vector<2x128xf32> to vector<2x32xf32>
    %182 = vector.extract_strided_slice %180 {offsets = [0, 32], sizes = [2, 32], strides = [1, 1]} : vector<2x128xf32> to vector<2x32xf32>
    %183 = vector.extract_strided_slice %180 {offsets = [0, 96], sizes = [2, 32], strides = [1, 1]} : vector<2x128xf32> to vector<2x32xf32>
    %184 = vector.extract_strided_slice %175 {offsets = [0, 64], sizes = [2, 32], strides = [1, 1]} : vector<2x128xf32> to vector<2x32xf32>
    %185 = math.tanh %184 : vector<2x32xf32>
    %186 = arith.mulf %182, %171 : vector<2x32xf32>
    %187 = arith.mulf %181, %185 : vector<2x32xf32>
    %188 = arith.addf %186, %187 : vector<2x32xf32>
    %189 = math.tanh %188 : vector<2x32xf32>
    %190 = arith.mulf %183, %189 : vector<2x32xf32>
    %191 = vector.extract_strided_slice %169 {offsets = [2, 0], sizes = [2, 128], strides = [1, 1]} : vector<16x128xf32> to vector<2x128xf32>
    %192 = arith.truncf %190 : vector<2x32xf32> to vector<2x32xbf16>
    %cst_36 = arith.constant dense<0.000000e+00> : vector<2x128xf32>
    %193 = tpu.matmul %192, %164, %cst_36 {dimension_numbers = #tpu.dot_dimension_numbers<[1], [0], [0], [1], [0, 0, 1, 1], [], []>} : vector<2x32xbf16>, vector<32x128xbf16>, vector<2x128xf32> -> vector<2x128xf32>
    %194 = arith.addf %191, %193 : vector<2x128xf32>
    %195 = arith.negf %194 : vector<2x128xf32>
    %196 = math.exp %195 : vector<2x128xf32>
    %cst_37 = arith.constant 1.000000e+00 : f32
    %197 = vector.broadcast %cst_37 : f32 to vector<2x128xf32>
    %198 = arith.addf %197, %196 : vector<2x128xf32>
    %199 = arith.divf %197, %198 : vector<2x128xf32>
    %200 = vector.extract_strided_slice %199 {offsets = [0, 0], sizes = [2, 32], strides = [1, 1]} : vector<2x128xf32> to vector<2x32xf32>
    %201 = vector.extract_strided_slice %199 {offsets = [0, 32], sizes = [2, 32], strides = [1, 1]} : vector<2x128xf32> to vector<2x32xf32>
    %202 = vector.extract_strided_slice %199 {offsets = [0, 96], sizes = [2, 32], strides = [1, 1]} : vector<2x128xf32> to vector<2x32xf32>
    %203 = vector.extract_strided_slice %194 {offsets = [0, 64], sizes = [2, 32], strides = [1, 1]} : vector<2x128xf32> to vector<2x32xf32>
    %204 = math.tanh %203 : vector<2x32xf32>
    %205 = arith.mulf %201, %188 : vector<2x32xf32>
    %206 = arith.mulf %200, %204 : vector<2x32xf32>
    %207 = arith.addf %205, %206 : vector<2x32xf32>
    %208 = math.tanh %207 : vector<2x32xf32>
    %209 = arith.mulf %202, %208 : vector<2x32xf32>
    %210 = vector.extract_strided_slice %169 {offsets = [4, 0], sizes = [2, 128], strides = [1, 1]} : vector<16x128xf32> to vector<2x128xf32>
    %211 = arith.truncf %209 : vector<2x32xf32> to vector<2x32xbf16>
    %cst_38 = arith.constant dense<0.000000e+00> : vector<2x128xf32>
    %212 = tpu.matmul %211, %164, %cst_38 {dimension_numbers = #tpu.dot_dimension_numbers<[1], [0], [0], [1], [0, 0, 1, 1], [], []>} : vector<2x32xbf16>, vector<32x128xbf16>, vector<2x128xf32> -> vector<2x128xf32>
    %213 = arith.addf %210, %212 : vector<2x128xf32>
    %214 = arith.negf %213 : vector<2x128xf32>
    %215 = math.exp %214 : vector<2x128xf32>
    %cst_39 = arith.constant 1.000000e+00 : f32
    %216 = vector.broadcast %cst_39 : f32 to vector<2x128xf32>
    %217 = arith.addf %216, %215 : vector<2x128xf32>
    %218 = arith.divf %216, %217 : vector<2x128xf32>
    %219 = vector.extract_strided_slice %218 {offsets = [0, 0], sizes = [2, 32], strides = [1, 1]} : vector<2x128xf32> to vector<2x32xf32>
    %220 = vector.extract_strided_slice %218 {offsets = [0, 32], sizes = [2, 32], strides = [1, 1]} : vector<2x128xf32> to vector<2x32xf32>
    %221 = vector.extract_strided_slice %218 {offsets = [0, 96], sizes = [2, 32], strides = [1, 1]} : vector<2x128xf32> to vector<2x32xf32>
    %222 = vector.extract_strided_slice %213 {offsets = [0, 64], sizes = [2, 32], strides = [1, 1]} : vector<2x128xf32> to vector<2x32xf32>
    %223 = math.tanh %222 : vector<2x32xf32>
    %224 = arith.mulf %220, %207 : vector<2x32xf32>
    %225 = arith.mulf %219, %223 : vector<2x32xf32>
    %226 = arith.addf %224, %225 : vector<2x32xf32>
    %227 = math.tanh %226 : vector<2x32xf32>
    %228 = arith.mulf %221, %227 : vector<2x32xf32>
    %229 = vector.extract_strided_slice %169 {offsets = [6, 0], sizes = [2, 128], strides = [1, 1]} : vector<16x128xf32> to vector<2x128xf32>
    %230 = arith.truncf %228 : vector<2x32xf32> to vector<2x32xbf16>
    %cst_40 = arith.constant dense<0.000000e+00> : vector<2x128xf32>
    %231 = tpu.matmul %230, %164, %cst_40 {dimension_numbers = #tpu.dot_dimension_numbers<[1], [0], [0], [1], [0, 0, 1, 1], [], []>} : vector<2x32xbf16>, vector<32x128xbf16>, vector<2x128xf32> -> vector<2x128xf32>
    %232 = arith.addf %229, %231 : vector<2x128xf32>
    %233 = arith.negf %232 : vector<2x128xf32>
    %234 = math.exp %233 : vector<2x128xf32>
    %cst_41 = arith.constant 1.000000e+00 : f32
    %235 = vector.broadcast %cst_41 : f32 to vector<2x128xf32>
    %236 = arith.addf %235, %234 : vector<2x128xf32>
    %237 = arith.divf %235, %236 : vector<2x128xf32>
    %238 = vector.extract_strided_slice %237 {offsets = [0, 0], sizes = [2, 32], strides = [1, 1]} : vector<2x128xf32> to vector<2x32xf32>
    %239 = vector.extract_strided_slice %237 {offsets = [0, 32], sizes = [2, 32], strides = [1, 1]} : vector<2x128xf32> to vector<2x32xf32>
    %240 = vector.extract_strided_slice %237 {offsets = [0, 96], sizes = [2, 32], strides = [1, 1]} : vector<2x128xf32> to vector<2x32xf32>
    %241 = vector.extract_strided_slice %232 {offsets = [0, 64], sizes = [2, 32], strides = [1, 1]} : vector<2x128xf32> to vector<2x32xf32>
    %242 = math.tanh %241 : vector<2x32xf32>
    %243 = arith.mulf %239, %226 : vector<2x32xf32>
    %244 = arith.mulf %238, %242 : vector<2x32xf32>
    %245 = arith.addf %243, %244 : vector<2x32xf32>
    %246 = math.tanh %245 : vector<2x32xf32>
    %247 = arith.mulf %240, %246 : vector<2x32xf32>
    %248 = vector.extract_strided_slice %169 {offsets = [8, 0], sizes = [2, 128], strides = [1, 1]} : vector<16x128xf32> to vector<2x128xf32>
    %249 = arith.truncf %247 : vector<2x32xf32> to vector<2x32xbf16>
    %cst_42 = arith.constant dense<0.000000e+00> : vector<2x128xf32>
    %250 = tpu.matmul %249, %164, %cst_42 {dimension_numbers = #tpu.dot_dimension_numbers<[1], [0], [0], [1], [0, 0, 1, 1], [], []>} : vector<2x32xbf16>, vector<32x128xbf16>, vector<2x128xf32> -> vector<2x128xf32>
    %251 = arith.addf %248, %250 : vector<2x128xf32>
    %252 = arith.negf %251 : vector<2x128xf32>
    %253 = math.exp %252 : vector<2x128xf32>
    %cst_43 = arith.constant 1.000000e+00 : f32
    %254 = vector.broadcast %cst_43 : f32 to vector<2x128xf32>
    %255 = arith.addf %254, %253 : vector<2x128xf32>
    %256 = arith.divf %254, %255 : vector<2x128xf32>
    %257 = vector.extract_strided_slice %256 {offsets = [0, 0], sizes = [2, 32], strides = [1, 1]} : vector<2x128xf32> to vector<2x32xf32>
    %258 = vector.extract_strided_slice %256 {offsets = [0, 32], sizes = [2, 32], strides = [1, 1]} : vector<2x128xf32> to vector<2x32xf32>
    %259 = vector.extract_strided_slice %256 {offsets = [0, 96], sizes = [2, 32], strides = [1, 1]} : vector<2x128xf32> to vector<2x32xf32>
    %260 = vector.extract_strided_slice %251 {offsets = [0, 64], sizes = [2, 32], strides = [1, 1]} : vector<2x128xf32> to vector<2x32xf32>
    %261 = math.tanh %260 : vector<2x32xf32>
    %262 = arith.mulf %258, %245 : vector<2x32xf32>
    %263 = arith.mulf %257, %261 : vector<2x32xf32>
    %264 = arith.addf %262, %263 : vector<2x32xf32>
    %265 = math.tanh %264 : vector<2x32xf32>
    %266 = arith.mulf %259, %265 : vector<2x32xf32>
    %267 = vector.extract_strided_slice %169 {offsets = [10, 0], sizes = [2, 128], strides = [1, 1]} : vector<16x128xf32> to vector<2x128xf32>
    %268 = arith.truncf %266 : vector<2x32xf32> to vector<2x32xbf16>
    %cst_44 = arith.constant dense<0.000000e+00> : vector<2x128xf32>
    %269 = tpu.matmul %268, %164, %cst_44 {dimension_numbers = #tpu.dot_dimension_numbers<[1], [0], [0], [1], [0, 0, 1, 1], [], []>} : vector<2x32xbf16>, vector<32x128xbf16>, vector<2x128xf32> -> vector<2x128xf32>
    %270 = arith.addf %267, %269 : vector<2x128xf32>
    %271 = arith.negf %270 : vector<2x128xf32>
    %272 = math.exp %271 : vector<2x128xf32>
    %cst_45 = arith.constant 1.000000e+00 : f32
    %273 = vector.broadcast %cst_45 : f32 to vector<2x128xf32>
    %274 = arith.addf %273, %272 : vector<2x128xf32>
    %275 = arith.divf %273, %274 : vector<2x128xf32>
    %276 = vector.extract_strided_slice %275 {offsets = [0, 0], sizes = [2, 32], strides = [1, 1]} : vector<2x128xf32> to vector<2x32xf32>
    %277 = vector.extract_strided_slice %275 {offsets = [0, 32], sizes = [2, 32], strides = [1, 1]} : vector<2x128xf32> to vector<2x32xf32>
    %278 = vector.extract_strided_slice %275 {offsets = [0, 96], sizes = [2, 32], strides = [1, 1]} : vector<2x128xf32> to vector<2x32xf32>
    %279 = vector.extract_strided_slice %270 {offsets = [0, 64], sizes = [2, 32], strides = [1, 1]} : vector<2x128xf32> to vector<2x32xf32>
    %280 = math.tanh %279 : vector<2x32xf32>
    %281 = arith.mulf %277, %264 : vector<2x32xf32>
    %282 = arith.mulf %276, %280 : vector<2x32xf32>
    %283 = arith.addf %281, %282 : vector<2x32xf32>
    %284 = math.tanh %283 : vector<2x32xf32>
    %285 = arith.mulf %278, %284 : vector<2x32xf32>
    %286 = vector.extract_strided_slice %169 {offsets = [12, 0], sizes = [2, 128], strides = [1, 1]} : vector<16x128xf32> to vector<2x128xf32>
    %287 = arith.truncf %285 : vector<2x32xf32> to vector<2x32xbf16>
    %cst_46 = arith.constant dense<0.000000e+00> : vector<2x128xf32>
    %288 = tpu.matmul %287, %164, %cst_46 {dimension_numbers = #tpu.dot_dimension_numbers<[1], [0], [0], [1], [0, 0, 1, 1], [], []>} : vector<2x32xbf16>, vector<32x128xbf16>, vector<2x128xf32> -> vector<2x128xf32>
    %289 = arith.addf %286, %288 : vector<2x128xf32>
    %290 = arith.negf %289 : vector<2x128xf32>
    %291 = math.exp %290 : vector<2x128xf32>
    %cst_47 = arith.constant 1.000000e+00 : f32
    %292 = vector.broadcast %cst_47 : f32 to vector<2x128xf32>
    %293 = arith.addf %292, %291 : vector<2x128xf32>
    %294 = arith.divf %292, %293 : vector<2x128xf32>
    %295 = vector.extract_strided_slice %294 {offsets = [0, 0], sizes = [2, 32], strides = [1, 1]} : vector<2x128xf32> to vector<2x32xf32>
    %296 = vector.extract_strided_slice %294 {offsets = [0, 32], sizes = [2, 32], strides = [1, 1]} : vector<2x128xf32> to vector<2x32xf32>
    %297 = vector.extract_strided_slice %294 {offsets = [0, 96], sizes = [2, 32], strides = [1, 1]} : vector<2x128xf32> to vector<2x32xf32>
    %298 = vector.extract_strided_slice %289 {offsets = [0, 64], sizes = [2, 32], strides = [1, 1]} : vector<2x128xf32> to vector<2x32xf32>
    %299 = math.tanh %298 : vector<2x32xf32>
    %300 = arith.mulf %296, %283 : vector<2x32xf32>
    %301 = arith.mulf %295, %299 : vector<2x32xf32>
    %302 = arith.addf %300, %301 : vector<2x32xf32>
    %303 = math.tanh %302 : vector<2x32xf32>
    %304 = arith.mulf %297, %303 : vector<2x32xf32>
    %305 = vector.extract_strided_slice %169 {offsets = [14, 0], sizes = [2, 128], strides = [1, 1]} : vector<16x128xf32> to vector<2x128xf32>
    %306 = arith.truncf %304 : vector<2x32xf32> to vector<2x32xbf16>
    %cst_48 = arith.constant dense<0.000000e+00> : vector<2x128xf32>
    %307 = tpu.matmul %306, %164, %cst_48 {dimension_numbers = #tpu.dot_dimension_numbers<[1], [0], [0], [1], [0, 0, 1, 1], [], []>} : vector<2x32xbf16>, vector<32x128xbf16>, vector<2x128xf32> -> vector<2x128xf32>
    %308 = arith.addf %305, %307 : vector<2x128xf32>
    %309 = arith.negf %308 : vector<2x128xf32>
    %310 = math.exp %309 : vector<2x128xf32>
    %cst_49 = arith.constant 1.000000e+00 : f32
    %311 = vector.broadcast %cst_49 : f32 to vector<2x128xf32>
    %312 = arith.addf %311, %310 : vector<2x128xf32>
    %313 = arith.divf %311, %312 : vector<2x128xf32>
    %314 = vector.extract_strided_slice %313 {offsets = [0, 0], sizes = [2, 32], strides = [1, 1]} : vector<2x128xf32> to vector<2x32xf32>
    %315 = vector.extract_strided_slice %313 {offsets = [0, 32], sizes = [2, 32], strides = [1, 1]} : vector<2x128xf32> to vector<2x32xf32>
    %316 = vector.extract_strided_slice %313 {offsets = [0, 96], sizes = [2, 32], strides = [1, 1]} : vector<2x128xf32> to vector<2x32xf32>
    %317 = vector.extract_strided_slice %308 {offsets = [0, 64], sizes = [2, 32], strides = [1, 1]} : vector<2x128xf32> to vector<2x32xf32>
    %318 = math.tanh %317 : vector<2x32xf32>
    %319 = arith.mulf %315, %302 : vector<2x32xf32>
    %320 = arith.mulf %314, %318 : vector<2x32xf32>
    %321 = arith.addf %319, %320 : vector<2x32xf32>
    %322 = math.tanh %321 : vector<2x32xf32>
    %323 = arith.mulf %316, %322 : vector<2x32xf32>
    %c0_50 = arith.constant 0 : index
    %c0_51 = arith.constant 0 : index
    %324 = vector.load %arg8[%c0_50, %c0_51] : memref<32x4xf32, #tpu.memory_space<vmem>>, vector<32x4xf32>
    %cst_52 = arith.constant dense<0.000000e+00> : vector<2x4xf32>
    %325 = tpu.matmul %323, %324, %cst_52 {dimension_numbers = #tpu.dot_dimension_numbers<[1], [0], [0], [1], [0, 0, 1, 1], [], []>} : vector<2x32xf32>, vector<32x4xf32>, vector<2x4xf32> -> vector<2x4xf32>
    %c0_53 = arith.constant 0 : index
    %c0_54 = arith.constant 0 : index
    %326 = vector.load %arg9[%c0_53, %c0_54] : memref<1x4xf32, #tpu.memory_space<vmem>>, vector<1x4xf32>
    %327 = vector.broadcast %326 : vector<1x4xf32> to vector<2x4xf32>
    %328 = arith.addf %325, %327 : vector<2x4xf32>
    %c0_55 = arith.constant 0 : index
    %c0_56 = arith.constant 0 : index
    %329 = vector.load %arg10[%c0_55, %c0_56] : memref<2x4xf32, #tpu.memory_space<vmem>>, vector<2x4xf32>
    tpu.vector_store %arg10[%c0_55, %c0_56], %328 {strides = array<i32>} : memref<2x4xf32, #tpu.memory_space<vmem>>, vector<2x4xf32>,
    return
  }
  func.func @transform_0(%arg0: i32) -> (i32, i32) {
    %c0_i32 = arith.constant 0 : i32
    %c0_i32_0 = arith.constant 0 : i32
    %c0_i32_1 = arith.constant 0 : i32
    return %c0_i32, %c0_i32_0 : i32, i32
  }
  func.func @transform_1(%arg0: i32) -> (i32, i32) {
    %c0_i32 = arith.constant 0 : i32
    %c0_i32_0 = arith.constant 0 : i32
    %c0_i32_1 = arith.constant 0 : i32
    return %c0_i32, %c0_i32_0 : i32, i32
  }
  func.func @transform_2(%arg0: i32) -> (i32, i32) {
    %c0_i32 = arith.constant 0 : i32
    %c0_i32_0 = arith.constant 0 : i32
    %c0_i32_1 = arith.constant 0 : i32
    return %c0_i32, %c0_i32_0 : i32, i32
  }
  func.func @transform_3(%arg0: i32) -> (i32, i32) {
    %c0_i32 = arith.constant 0 : i32
    %c0_i32_0 = arith.constant 0 : i32
    %c0_i32_1 = arith.constant 0 : i32
    return %c0_i32, %c0_i32_0 : i32, i32
  }
  func.func @transform_4(%arg0: i32) -> (i32, i32) {
    %c0_i32 = arith.constant 0 : i32
    %c0_i32_0 = arith.constant 0 : i32
    %c0_i32_1 = arith.constant 0 : i32
    return %c0_i32, %c0_i32_0 : i32, i32
  }
  func.func @transform_5(%arg0: i32) -> (i32, i32) {
    %c0_i32 = arith.constant 0 : i32
    %c0_i32_0 = arith.constant 0 : i32
    %c0_i32_1 = arith.constant 0 : i32
    return %c0_i32, %c0_i32_0 : i32, i32
  }
  func.func @transform_6(%arg0: i32) -> (i32, i32) {
    %c0_i32 = arith.constant 0 : i32
    %c0_i32_0 = arith.constant 0 : i32
    %c0_i32_1 = arith.constant 0 : i32
    return %c0_i32, %c0_i32_0 : i32, i32
  }
  func.func @transform_7(%arg0: i32) -> (i32, i32) {
    %c0_i32 = arith.constant 0 : i32
    %c0_i32_0 = arith.constant 0 : i32
    %c0_i32_1 = arith.constant 0 : i32
    return %c0_i32, %c0_i32_0 : i32, i32
  }
  func.func @transform_8(%arg0: i32) -> (i32, i32) {
    %c0_i32 = arith.constant 0 : i32
    %c0_i32_0 = arith.constant 0 : i32
    %c0_i32_1 = arith.constant 0 : i32
    return %c0_i32, %c0_i32_0 : i32, i32
  }
  func.func @transform_9(%arg0: i32) -> (i32, i32) {
    %c0_i32 = arith.constant 0 : i32
    %c0_i32_0 = arith.constant 0 : i32
    %c0_i32_1 = arith.constant 0 : i32
    return %c0_i32, %c0_i32_0 : i32, i32
  }
}

</mosaic_0001>

<llo_original>
// kernel: tpu_custom_call.1
$region0: #{tpu_custom_call.1}
  #allocation0 [shape = 'u32[]', space=smem, size = 0x4, offset = 0x4, fixed_abs, tag = 'smem constant byte address 0x4 - core index']
  #allocation1 [shape = 'u32[144,128]{1,0:T(1,128)}', space=vmem, size = 0x12000, scoped, tag = 'internal scratch']
  %s0 = inlined_call_operand.vmem [shape: f32[16,32], index: 0, kind: input, shape index: {}]
  %s1 = inlined_call_operand.vmem [shape: bf16[32,128], index: 1, kind: input, shape index: {}]
  %s2 = inlined_call_operand.hbm [shape: bf16[32,128], index: 2, kind: input, shape index: {}]
  %s3 = inlined_call_operand.vmem [shape: f32[1,128], index: 3, kind: input, shape index: {}]
  %s4 = inlined_call_operand.hbm [shape: bf16[32,128], index: 4, kind: input, shape index: {}]
  %s5 = inlined_call_operand.hbm [shape: bf16[32,128], index: 5, kind: input, shape index: {}]
  %s6 = inlined_call_operand.vmem [shape: f32[1,128], index: 6, kind: input, shape index: {}]
  %s7 = inlined_call_operand.vmem [shape: f32[32,4], index: 7, kind: input, shape index: {}]
  %s8 = inlined_call_operand.vmem [shape: f32[1,4], index: 8, kind: input, shape index: {}]
  %s9 = inlined_call_operand.hbm [shape: f32[2,4], index: 9, kind: output, shape index: {}]
  %s10 = sld [smem:[#allocation0]]
  $region58: #{tpu_custom_call.1} parent=0
    _
  %s12 = ssub.s32 1, %s10
  %s13 = scalar_select 0, %s12, %s10
  $region1: #{tpu_custom_call.1} parent=0
    #allocation2 [shape = 'u8[8192]{0}', space=vmem, size = 0x2000, scoped, tag = 'input window, operand 2, single buffered']
    #allocation3 [shape = 's32[1]{0}', space=sflag, size = 0x4, scoped, tag = 'scoped memory for tpu_custom_call.1']
    #allocation4 [shape = 's32[1]{0}', space=sflag, size = 0x4, scoped, tag = 'scoped memory for tpu_custom_call.1']
    #allocation5 [shape = 'u8[8192]{0}', space=vmem, size = 0x2000, scoped, tag = 'input window, operand 4, single buffered']
    #allocation6 [shape = 's32[1]{0}', space=sflag, size = 0x4, scoped, tag = 'scoped memory for tpu_custom_call.1']
    #allocation7 [shape = 'u8[8192]{0}', space=vmem, size = 0x2000, scoped, tag = 'input window, operand 5, single buffered']
    #allocation8 [shape = 'u8[1024]{0}', space=vmem, size = 0x400, scoped, tag = 'output window, operand 0, single buffered']
    %14 = vsyncpa [#allocation3], 0
    %15 = vsyncpa [#allocation6], 0
    %16 = vsyncpa [#allocation4], 0
    // Predicated region
    $region2: #{tpu_custom_call.1} parent=1 // pred_check
      _
    $region3: #{tpu_custom_call.1} parent=1 // pred_check_branch
      %18 = sbr.rel (0) target = $region5
    $region4: #{tpu_custom_call.1} parent=1 // pred_region
      _
    $region5: #{tpu_custom_call.1} parent=1 // pred_fallthru
      _
    // Predicated region
    $region6: #{tpu_custom_call.1} parent=1 // pred_check
      _
    $region7: #{tpu_custom_call.1} parent=1 // pred_check_branch
      %20 = sbr.rel (0) target = $region9
    $region8: #{tpu_custom_call.1} parent=1 // pred_region
      _
    $region9: #{tpu_custom_call.1} parent=1 // pred_fallthru
      _
    // Predicated region
    $region10: #{tpu_custom_call.1} parent=1 // pred_check
      _
    $region11: #{tpu_custom_call.1} parent=1 // pred_check_branch
      %22 = sbr.rel (0) target = $region13
    $region12: #{tpu_custom_call.1} parent=1 // pred_region
      %s24 = ssub.s32 256, 256
      %25 = vsyncadd [#allocation3], %s24
      %s26 = sshll.u32 [#allocation2], 4
      %s27 = int_to_ptr.vmem [resolvable:$true] %s26
      %32 = dma.hbm_to_vmem [thread:$0]  %s2, 256, %s27, [#allocation3], 64, 64, 4
    $region13: #{tpu_custom_call.1} parent=1 // pred_fallthru
      _
    // Predicated region
    $region14: #{tpu_custom_call.1} parent=1 // pred_check
      _
    $region15: #{tpu_custom_call.1} parent=1 // pred_check_branch
      %34 = sbr.rel (0) target = $region17
    $region16: #{tpu_custom_call.1} parent=1 // pred_region
      _
    $region17: #{tpu_custom_call.1} parent=1 // pred_fallthru
      _
    // Predicated region
    $region18: #{tpu_custom_call.1} parent=1 // pred_check
      _
    $region19: #{tpu_custom_call.1} parent=1 // pred_check_branch
      %36 = sbr.rel (0) target = $region21
    $region20: #{tpu_custom_call.1} parent=1 // pred_region
      %s38 = ssub.s32 256, 256
      %39 = vsyncadd [#allocation6], %s38
      %s40 = sshll.u32 [#allocation5], 4
      %s41 = int_to_ptr.vmem [resolvable:$true] %s40
      %46 = dma.hbm_to_vmem [thread:$0]  %s4, 256, %s41, [#allocation6], 64, 64, 4
    $region21: #{tpu_custom_call.1} parent=1 // pred_fallthru
      _
    // Predicated region
    $region22: #{tpu_custom_call.1} parent=1 // pred_check
      _
    $region23: #{tpu_custom_call.1} parent=1 // pred_check_branch
      %48 = sbr.rel (0) target = $region25
    $region24: #{tpu_custom_call.1} parent=1 // pred_region
      %s50 = ssub.s32 256, 256
      %51 = vsyncadd [#allocation6], %s50
      %s52 = sshll.u32 [#allocation7], 4
      %s53 = int_to_ptr.vmem [resolvable:$true] %s52
      %58 = dma.hbm_to_vmem [thread:$0]  %s5, 256, %s53, [#allocation6], 64, 64, 4
    $region25: #{tpu_custom_call.1} parent=1 // pred_fallthru
      _
    // Predicated region
    $region26: #{tpu_custom_call.1} parent=1 // pred_check
      _
    $region27: #{tpu_custom_call.1} parent=1 // pred_check_branch
      %60 = sbr.rel (0) target = $region29
    $region28: #{tpu_custom_call.1} parent=1 // pred_region
      _
    $region29: #{tpu_custom_call.1} parent=1 // pred_fallthru
      _
    // Predicated region
    $region30: #{tpu_custom_call.1} parent=1 // pred_check
      _
    $region31: #{tpu_custom_call.1} parent=1 // pred_check_branch
      %62 = sbr.rel (0) target = $region33
    $region32: #{tpu_custom_call.1} parent=1 // pred_region
      _
    $region33: #{tpu_custom_call.1} parent=1 // pred_fallthru
      _
    // Predicated region
    $region34: #{tpu_custom_call.1} parent=1 // pred_check
      _
    $region35: #{tpu_custom_call.1} parent=1 // pred_check_branch
      %64 = sbr.rel (0) target = $region37
    $region36: #{tpu_custom_call.1} parent=1 // pred_region
      _
    $region37: #{tpu_custom_call.1} parent=1 // pred_fallthru
      _
    // Predicated region
    $region38: #{tpu_custom_call.1} parent=1 // pred_check
      _
    $region39: #{tpu_custom_call.1} parent=1 // pred_check_branch
      %66 = sbr.rel (0) target = $region41
    $region40: #{tpu_custom_call.1} parent=1 // pred_region
      %67 = dma.done [#allocation3], 256
    $region41: #{tpu_custom_call.1} parent=1 // pred_fallthru
      _
    // Predicated region
    $region42: #{tpu_custom_call.1} parent=1 // pred_check
      _
    $region43: #{tpu_custom_call.1} parent=1 // pred_check_branch
      %69 = sbr.rel (0) target = $region45
    $region44: #{tpu_custom_call.1} parent=1 // pred_region
      %70 = dma.done [#allocation6], 256
    $region45: #{tpu_custom_call.1} parent=1 // pred_fallthru
      _
    // Predicated region
    $region46: #{tpu_custom_call.1} parent=1 // pred_check
      _
    $region47: #{tpu_custom_call.1} parent=1 // pred_check_branch
      %72 = sbr.rel (0) target = $region49
    $region48: #{tpu_custom_call.1} parent=1 // pred_region
      %73 = dma.done [#allocation6], 256
    $region49: #{tpu_custom_call.1} parent=1 // pred_fallthru
      _
    %v75 = vld [vmem:[%s0] sm:$0xff]
    %v76 = vld [vmem:[%s0 + $0x8] sm:$0xff]
    %v77 = vld [vmem:[%s1] sm:$0xf]
    %v78 = vld [vmem:[%s1 + $0x4] sm:$0xf]
    %v79 = vld [vmem:[%s1 + $0x8] sm:$0xf]
    %v80 = vld [vmem:[%s1 + $0xc] sm:$0xf]
    %v81 = vld [vmem:[#allocation2] sm:$0xf]
    %v82 = vld [vmem:[#allocation2 + $0x4] sm:$0xf]
    %v83 = vld [vmem:[#allocation2 + $0x8] sm:$0xf]
    %v84 = vld [vmem:[#allocation2 + $0xc] sm:$0xf]
    %v85 = vld [vmem:[%s3] sm:$0x1]
    %v86 = vpack.c.bf16 %v76, %v75
    %v88 = vlaneseq
    %v89 = vshrl.u32 %v88, 7
    %v90 = vsub.s32 0, %v89
    %v91 = vrot.slane %v85, %v90
    %v97 = vunpack.c.l.b16 %v77
    %v98 = vunpack.c.l.b16 %v78
    %v99 = vunpack.c.l.b16 %v79
    %v100 = vunpack.c.l.b16 %v80
    %v101 = vpack.c.b16 %v98, %v97
    %v102 = vpack.c.b16 %v100, %v99
    %vm105 = vcmask 261120
    %v107 = vsel %vm105, %v86, 0
    %109 = vmatprep.subr.bf16.mxu0 0
    %110 = vmatpush1.bf16.msra.mxu0 0
    %111 = vmatprep.subr.bf16.mxu0 0
    %112 = vmatpush1.bf16.msra.mxu0 0
    %113 = vmatprep.subr.bf16.mxu0 0
    %114 = vmatpush1.bf16.msra.mxu0 0
    %115 = vmatprep.subr.bf16.mxu0 0
    %116 = vmatpush1.bf16.msra.mxu0 0
    %117 = vmatprep.subr.bf16.mxu0 0
    %118 = vmatpush1.bf16.msra.mxu0 0
    %119 = vmatprep.subr.bf16.mxu0 0
    %120 = vmatpush1.bf16.msra.mxu0 0
    %121 = vmatprep.subr.bf16.mxu0 0
    %122 = vmatpush1.bf16.msra.mxu0 %v102
    %123 = vmatprep.subr.bf16.mxu0 0
    %124 = vmatpush1.bf16.msra.mxu0 %v101
    %125 = vmatprep.subr.bf16.mxu0 0
    %126 = vmatpush2.bf16.msra.mxu0 0
    %127 = vmatprep.subr.bf16.mxu0 0
    %128 = vmatpush2.bf16.msra.mxu0 0
    %129 = vmatprep.subr.bf16.mxu0 0
    %130 = vmatpush2.bf16.msra.mxu0 0
    %131 = vmatprep.subr.bf16.mxu0 0
    %132 = vmatpush2.bf16.msra.mxu0 0
    %133 = vmatprep.subr.bf16.mxu0 0
    %134 = vmatpush2.bf16.msra.mxu0 0
    %135 = vmatprep.subr.bf16.mxu0 0
    %136 = vmatpush2.bf16.msra.mxu0 0
    %137 = vmatprep.subr.bf16.mxu0 0
    %138 = vmatpush2.bf16.msra.mxu0 0
    %139 = vmatprep.subr.bf16.mxu0 0
    %140 = vmatpush2.bf16.msra.mxu0 0
    %141 = vmatprep.mubr.bf16.mxu0 0
    %142 = vmatmul.mubr.bf16.gmra.mxu0 %v107
    %v143 = vpop.f32.mrf.mxu0
    %v144 = vadd.f32 %v91, %v143
    %v145 = vpop.f32.mrf.mxu0
    %v146 = vpop.f32.mrf.mxu0
    %v147 = vadd.f32 %v91, %v146
    %v148 = vpop.f32.mrf.mxu0
    %149 = vdwg.mxu0
    %v154 = vunpack.c.l.b16 %v81
    %v155 = vunpack.c.l.b16 %v82
    %v156 = vunpack.c.l.b16 %v83
    %v157 = vunpack.c.l.b16 %v84
    %v158 = vpack.c.b16 %v155, %v154
    %v159 = vpack.c.b16 %v157, %v156
    %v163 = vsel %vm105, 0, 0
    %165 = vmatprep.subr.bf16.mxu0 0
    %166 = vmatpush1.bf16.msra.mxu0 0
    %167 = vmatprep.subr.bf16.mxu0 0
    %168 = vmatpush1.bf16.msra.mxu0 0
    %169 = vmatprep.subr.bf16.mxu0 0
    %170 = vmatpush1.bf16.msra.mxu0 0
    %171 = vmatprep.subr.bf16.mxu0 0
    %172 = vmatpush1.bf16.msra.mxu0 0
    %173 = vmatprep.subr.bf16.mxu0 0
    %174 = vmatpush1.bf16.msra.mxu0 0
    %175 = vmatprep.subr.bf16.mxu0 0
    %176 = vmatpush1.bf16.msra.mxu0 0
    %177 = vmatprep.subr.bf16.mxu0 0
    %178 = vmatpush1.bf16.msra.mxu0 %v159
    %179 = vmatprep.subr.bf16.mxu0 0
    %180 = vmatpush1.bf16.msra.mxu0 %v158
    %181 = vmatprep.subr.bf16.mxu0 0
    %182 = vmatpush2.bf16.msra.mxu0 0
    %183 = vmatprep.subr.bf16.mxu0 0
    %184 = vmatpush2.bf16.msra.mxu0 0
    %185 = vmatprep.subr.bf16.mxu0 0
    %186 = vmatpush2.bf16.msra.mxu0 0
    %187 = vmatprep.subr.bf16.mxu0 0
    %188 = vmatpush2.bf16.msra.mxu0 0
    %189 = vmatprep.subr.bf16.mxu0 0
    %190 = vmatpush2.bf16.msra.mxu0 0
    %191 = vmatprep.subr.bf16.mxu0 0
    %192 = vmatpush2.bf16.msra.mxu0 0
    %193 = vmatprep.subr.bf16.mxu0 0
    %194 = vmatpush2.bf16.msra.mxu0 0
    %195 = vmatprep.subr.bf16.mxu0 0
    %196 = vmatpush2.bf16.msra.mxu0 0
    %197 = vmatprep.mubr.bf16.mxu0 0
    %198 = vmatmul.mubr.bf16.gmra.mxu0 %v163
    %v199 = vpop.f32.mrf.mxu0
    %v200 = vadd.f32 0.0, %v199
    %v201 = vpop.f32.mrf.mxu0
    %v202 = vpop.f32.mrf.mxu0
    %v203 = vpop.f32.mrf.mxu0
    %204 = vdwg.mxu0
    %v205 = vadd.f32 %v144, %v200
    %v206 = vxor.u32 %v205, 2147483648
    %v207 = vmul.f32 %v206, 1.442695
    %v208 = vpow.pop %v207
    %v209 = vadd.f32 %v208, 1.0
    %v210 = vrcp.pop %v209
    %v211 = vmul.f32 1.0, %v210
    %v212 = vtanh.pop %v205
    %v213 = vmul.f32 %v211, 0.0
    %215 = vrot.lane.b32.xlu0 %v212, 64
    %v216 = vpop.permute.xlu0 %215
    %v218 = vmul.f32 %v211, %v216
    %220 = vrot.lane.b32.xlu0 %v218, 32
    %v221 = vpop.permute.xlu0 %220
    %v223 = vadd.f32 %v213, %v221
    %v224 = vtanh.pop %v223
    %226 = vrot.lane.b32.xlu0 %v224, 64
    %v227 = vpop.permute.xlu0 %226
    %v229 = vmul.f32 %v211, %v227
    %v230 = vpack.c.bf16 %v229, %v229
    %232 = vrot.lane.b32.xlu0 %v230, 32
    %v233 = vpop.permute.xlu0 %232
    %v235 = vsel %vm105, %v233, 0
    %237 = vmatprep.subr.bf16.mxu0 0
    %238 = vmatpush1.bf16.msra.mxu0 0
    %239 = vmatprep.subr.bf16.mxu0 0
    %240 = vmatpush1.bf16.msra.mxu0 0
    %241 = vmatprep.subr.bf16.mxu0 0
    %242 = vmatpush1.bf16.msra.mxu0 0
    %243 = vmatprep.subr.bf16.mxu0 0
    %244 = vmatpush1.bf16.msra.mxu0 0
    %245 = vmatprep.subr.bf16.mxu0 0
    %246 = vmatpush1.bf16.msra.mxu0 0
    %247 = vmatprep.subr.bf16.mxu0 0
    %248 = vmatpush1.bf16.msra.mxu0 0
    %249 = vmatprep.subr.bf16.mxu0 0
    %250 = vmatpush1.bf16.msra.mxu0 %v159
    %251 = vmatprep.subr.bf16.mxu0 0
    %252 = vmatpush1.bf16.msra.mxu0 %v158
    %253 = vmatprep.subr.bf16.mxu0 0
    %254 = vmatpush2.bf16.msra.mxu0 0
    %255 = vmatprep.subr.bf16.mxu0 0
    %256 = vmatpush2.bf16.msra.mxu0 0
    %257 = vmatprep.subr.bf16.mxu0 0
    %258 = vmatpush2.bf16.msra.mxu0 0
    %259 = vmatprep.subr.bf16.mxu0 0
    %260 = vmatpush2.bf16.msra.mxu0 0
    %261 = vmatprep.subr.bf16.mxu0 0
    %262 = vmatpush2.bf16.msra.mxu0 0
    %263 = vmatprep.subr.bf16.mxu0 0
    %264 = vmatpush2.bf16.msra.mxu0 0
    %265 = vmatprep.subr.bf16.mxu0 0
    %266 = vmatpush2.bf16.msra.mxu0 0
    %267 = vmatprep.subr.bf16.mxu0 0
    %268 = vmatpush2.bf16.msra.mxu0 0
    %269 = vmatprep.mubr.bf16.mxu0 0
    %270 = vmatmul.mubr.bf16.gmra.mxu0 %v235
    %v271 = vpop.f32.mrf.mxu0
    %v272 = vadd.f32 0.0, %v271
    %v273 = vpop.f32.mrf.mxu0
    %v274 = vpop.f32.mrf.mxu0
    %v275 = vpop.f32.mrf.mxu0
    %276 = vdwg.mxu0
    %v278 = vrot.slane %v272, 6
    %v280 = vadd.f32 %v144, %v278
    %v281 = vxor.u32 %v280, 2147483648
    %v282 = vmul.f32 %v281, 1.442695
    %v283 = vpow.pop %v282
    %v284 = vadd.f32 %v283, 1.0
    %v285 = vrcp.pop %v284
    %v286 = vmul.f32 1.0, %v285
    %v287 = vtanh.pop %v280
    %v289 = vrot.slane %v223, 6
    %v291 = vmul.f32 %v286, %v289
    %293 = vrot.lane.b32.xlu0 %v287, 64
    %v294 = vpop.permute.xlu0 %293
    %v296 = vmul.f32 %v286, %v294
    %298 = vrot.lane.b32.xlu0 %v296, 32
    %v299 = vpop.permute.xlu0 %298
    %v301 = vadd.f32 %v291, %v299
    %v302 = vtanh.pop %v301
    %304 = vrot.lane.b32.xlu0 %v302, 64
    %v305 = vpop.permute.xlu0 %304
    %v307 = vmul.f32 %v286, %v305
    %v308 = vpack.c.bf16 %v307, %v307
    %v310 = vrot.slane %v308, 1
    %311 = vrot.lane.b32.xlu0 %v310, 32
    %v312 = vpop.permute.xlu0 %311
    %v314 = vsel %vm105, %v312, 0
    %316 = vmatprep.subr.bf16.mxu0 0
    %317 = vmatpush1.bf16.msra.mxu0 0
    %318 = vmatprep.subr.bf16.mxu0 0
    %319 = vmatpush1.bf16.msra.mxu0 0
    %320 = vmatprep.subr.bf16.mxu0 0
    %321 = vmatpush1.bf16.msra.mxu0 0
    %322 = vmatprep.subr.bf16.mxu0 0
    %323 = vmatpush1.bf16.msra.mxu0 0
    %324 = vmatprep.subr.bf16.mxu0 0
    %325 = vmatpush1.bf16.msra.mxu0 0
    %326 = vmatprep.subr.bf16.mxu0 0
    %327 = vmatpush1.bf16.msra.mxu0 0
    %328 = vmatprep.subr.bf16.mxu0 0
    %329 = vmatpush1.bf16.msra.mxu0 %v159
    %330 = vmatprep.subr.bf16.mxu0 0
    %331 = vmatpush1.bf16.msra.mxu0 %v158
    %332 = vmatprep.subr.bf16.mxu0 0
    %333 = vmatpush2.bf16.msra.mxu0 0
    %334 = vmatprep.subr.bf16.mxu0 0
    %335 = vmatpush2.bf16.msra.mxu0 0
    %336 = vmatprep.subr.bf16.mxu0 0
    %337 = vmatpush2.bf16.msra.mxu0 0
    %338 = vmatprep.subr.bf16.mxu0 0
    %339 = vmatpush2.bf16.msra.mxu0 0
    %340 = vmatprep.subr.bf16.mxu0 0
    %341 = vmatpush2.bf16.msra.mxu0 0
    %342 = vmatprep.subr.bf16.mxu0 0
    %343 = vmatpush2.bf16.msra.mxu0 0
    %344 = vmatprep.subr.bf16.mxu0 0
    %345 = vmatpush2.bf16.msra.mxu0 0
    %346 = vmatprep.subr.bf16.mxu0 0
    %347 = vmatpush2.bf16.msra.mxu0 0
    %348 = vmatprep.mubr.bf16.mxu0 0
    %349 = vmatmul.mubr.bf16.gmra.mxu0 %v314
    %v350 = vpop.f32.mrf.mxu0
    %v351 = vadd.f32 0.0, %v350
    %v352 = vpop.f32.mrf.mxu0
    %v353 = vpop.f32.mrf.mxu0
    %v354 = vpop.f32.mrf.mxu0
    %355 = vdwg.mxu0
    %v357 = vrot.slane %v351, 4
    %v359 = vadd.f32 %v144, %v357
    %v360 = vxor.u32 %v359, 2147483648
    %v361 = vmul.f32 %v360, 1.442695
    %v362 = vpow.pop %v361
    %v363 = vadd.f32 %v362, 1.0
    %v364 = vrcp.pop %v363
    %v365 = vmul.f32 1.0, %v364
    %v366 = vtanh.pop %v359
    %v368 = vrot.slane %v301, 6
    %v370 = vmul.f32 %v365, %v368
    %372 = vrot.lane.b32.xlu0 %v366, 64
    %v373 = vpop.permute.xlu0 %372
    %v375 = vmul.f32 %v365, %v373
    %377 = vrot.lane.b32.xlu0 %v375, 32
    %v378 = vpop.permute.xlu0 %377
    %v380 = vadd.f32 %v370, %v378
    %v381 = vtanh.pop %v380
    %383 = vrot.lane.b32.xlu0 %v381, 64
    %v384 = vpop.permute.xlu0 %383
    %v386 = vmul.f32 %v365, %v384
    %v387 = vpack.c.bf16 %v386, %v386
    %v389 = vrot.slane %v387, 2
    %390 = vrot.lane.b32.xlu0 %v389, 32
    %v391 = vpop.permute.xlu0 %390
    %v393 = vsel %vm105, %v391, 0
    %395 = vmatprep.subr.bf16.mxu0 0
    %396 = vmatpush1.bf16.msra.mxu0 0
    %397 = vmatprep.subr.bf16.mxu0 0
    %398 = vmatpush1.bf16.msra.mxu0 0
    %399 = vmatprep.subr.bf16.mxu0 0
    %400 = vmatpush1.bf16.msra.mxu0 0
    %401 = vmatprep.subr.bf16.mxu0 0
    %402 = vmatpush1.bf16.msra.mxu0 0
    %403 = vmatprep.subr.bf16.mxu0 0
    %404 = vmatpush1.bf16.msra.mxu0 0
    %405 = vmatprep.subr.bf16.mxu0 0
    %406 = vmatpush1.bf16.msra.mxu0 0
    %407 = vmatprep.subr.bf16.mxu0 0
    %408 = vmatpush1.bf16.msra.mxu0 %v159
    %409 = vmatprep.subr.bf16.mxu0 0
    %410 = vmatpush1.bf16.msra.mxu0 %v158
    %411 = vmatprep.subr.bf16.mxu0 0
    %412 = vmatpush2.bf16.msra.mxu0 0
    %413 = vmatprep.subr.bf16.mxu0 0
    %414 = vmatpush2.bf16.msra.mxu0 0
    %415 = vmatprep.subr.bf16.mxu0 0
    %416 = vmatpush2.bf16.msra.mxu0 0
    %417 = vmatprep.subr.bf16.mxu0 0
    %418 = vmatpush2.bf16.msra.mxu0 0
    %419 = vmatprep.subr.bf16.mxu0 0
    %420 = vmatpush2.bf16.msra.mxu0 0
    %421 = vmatprep.subr.bf16.mxu0 0
    %422 = vmatpush2.bf16.msra.mxu0 0
    %423 = vmatprep.subr.bf16.mxu0 0
    %424 = vmatpush2.bf16.msra.mxu0 0
    %425 = vmatprep.subr.bf16.mxu0 0
    %426 = vmatpush2.bf16.msra.mxu0 0
    %427 = vmatprep.mubr.bf16.mxu0 0
    %428 = vmatmul.mubr.bf16.gmra.mxu0 %v393
    %v429 = vpop.f32.mrf.mxu0
    %v430 = vadd.f32 0.0, %v429
    %v431 = vpop.f32.mrf.mxu0
    %v432 = vpop.f32.mrf.mxu0
    %v433 = vpop.f32.mrf.mxu0
    %434 = vdwg.mxu0
    %v436 = vrot.slane %v430, 2
    %v438 = vadd.f32 %v144, %v436
    %v439 = vxor.u32 %v438, 2147483648
    %v440 = vmul.f32 %v439, 1.442695
    %v441 = vpow.pop %v440
    %v442 = vadd.f32 %v441, 1.0
    %v443 = vrcp.pop %v442
    %v444 = vmul.f32 1.0, %v443
    %v445 = vtanh.pop %v438
    %v447 = vrot.slane %v380, 6
    %v449 = vmul.f32 %v444, %v447
    %451 = vrot.lane.b32.xlu0 %v445, 64
    %v452 = vpop.permute.xlu0 %451
    %v454 = vmul.f32 %v444, %v452
    %456 = vrot.lane.b32.xlu0 %v454, 32
    %v457 = vpop.permute.xlu0 %456
    %v459 = vadd.f32 %v449, %v457
    %v460 = vtanh.pop %v459
    %462 = vrot.lane.b32.xlu0 %v460, 64
    %v463 = vpop.permute.xlu0 %462
    %v465 = vmul.f32 %v444, %v463
    %v466 = vpack.c.bf16 %v465, %v465
    %v468 = vrot.slane %v466, 3
    %469 = vrot.lane.b32.xlu0 %v468, 32
    %v470 = vpop.permute.xlu0 %469
    %v472 = vsel %vm105, %v470, 0
    %474 = vmatprep.subr.bf16.mxu0 0
    %475 = vmatpush1.bf16.msra.mxu0 0
    %476 = vmatprep.subr.bf16.mxu0 0
    %477 = vmatpush1.bf16.msra.mxu0 0
    %478 = vmatprep.subr.bf16.mxu0 0
    %479 = vmatpush1.bf16.msra.mxu0 0
    %480 = vmatprep.subr.bf16.mxu0 0
    %481 = vmatpush1.bf16.msra.mxu0 0
    %482 = vmatprep.subr.bf16.mxu0 0
    %483 = vmatpush1.bf16.msra.mxu0 0
    %484 = vmatprep.subr.bf16.mxu0 0
    %485 = vmatpush1.bf16.msra.mxu0 0
    %486 = vmatprep.subr.bf16.mxu0 0
    %487 = vmatpush1.bf16.msra.mxu0 %v159
    %488 = vmatprep.subr.bf16.mxu0 0
    %489 = vmatpush1.bf16.msra.mxu0 %v158
    %490 = vmatprep.subr.bf16.mxu0 0
    %491 = vmatpush2.bf16.msra.mxu0 0
    %492 = vmatprep.subr.bf16.mxu0 0
    %493 = vmatpush2.bf16.msra.mxu0 0
    %494 = vmatprep.subr.bf16.mxu0 0
    %495 = vmatpush2.bf16.msra.mxu0 0
    %496 = vmatprep.subr.bf16.mxu0 0
    %497 = vmatpush2.bf16.msra.mxu0 0
    %498 = vmatprep.subr.bf16.mxu0 0
    %499 = vmatpush2.bf16.msra.mxu0 0
    %500 = vmatprep.subr.bf16.mxu0 0
    %501 = vmatpush2.bf16.msra.mxu0 0
    %502 = vmatprep.subr.bf16.mxu0 0
    %503 = vmatpush2.bf16.msra.mxu0 0
    %504 = vmatprep.subr.bf16.mxu0 0
    %505 = vmatpush2.bf16.msra.mxu0 0
    %506 = vmatprep.mubr.bf16.mxu0 0
    %507 = vmatmul.mubr.bf16.gmra.mxu0 %v472
    %v508 = vpop.f32.mrf.mxu0
    %v509 = vadd.f32 0.0, %v508
    %v510 = vpop.f32.mrf.mxu0
    %v511 = vpop.f32.mrf.mxu0
    %v512 = vpop.f32.mrf.mxu0
    %513 = vdwg.mxu0
    %v514 = vadd.f32 %v147, %v509
    %v515 = vxor.u32 %v514, 2147483648
    %v516 = vmul.f32 %v515, 1.442695
    %v517 = vpow.pop %v516
    %v518 = vadd.f32 %v517, 1.0
    %v519 = vrcp.pop %v518
    %v520 = vmul.f32 1.0, %v519
    %v521 = vtanh.pop %v514
    %v523 = vrot.slane %v459, 6
    %v525 = vmul.f32 %v520, %v523
    %527 = vrot.lane.b32.xlu0 %v521, 64
    %v528 = vpop.permute.xlu0 %527
    %v530 = vmul.f32 %v520, %v528
    %532 = vrot.lane.b32.xlu0 %v530, 32
    %v533 = vpop.permute.xlu0 %532
    %v535 = vadd.f32 %v525, %v533
    %v536 = vtanh.pop %v535
    %538 = vrot.lane.b32.xlu0 %v536, 64
    %v539 = vpop.permute.xlu0 %538
    %v541 = vmul.f32 %v520, %v539
    %v542 = vpack.c.bf16 %v541, %v541
    %544 = vrot.lane.b32.xlu0 %v542, 32
    %v545 = vpop.permute.xlu0 %544
    %v547 = vsel %vm105, %v545, 0
    %549 = vmatprep.subr.bf16.mxu0 0
    %550 = vmatpush1.bf16.msra.mxu0 0
    %551 = vmatprep.subr.bf16.mxu0 0
    %552 = vmatpush1.bf16.msra.mxu0 0
    %553 = vmatprep.subr.bf16.mxu0 0
    %554 = vmatpush1.bf16.msra.mxu0 0
    %555 = vmatprep.subr.bf16.mxu0 0
    %556 = vmatpush1.bf16.msra.mxu0 0
    %557 = vmatprep.subr.bf16.mxu0 0
    %558 = vmatpush1.bf16.msra.mxu0 0
    %559 = vmatprep.subr.bf16.mxu0 0
    %560 = vmatpush1.bf16.msra.mxu0 0
    %561 = vmatprep.subr.bf16.mxu0 0
    %562 = vmatpush1.bf16.msra.mxu0 %v159
    %563 = vmatprep.subr.bf16.mxu0 0
    %564 = vmatpush1.bf16.msra.mxu0 %v158
    %565 = vmatprep.subr.bf16.mxu0 0
    %566 = vmatpush2.bf16.msra.mxu0 0
    %567 = vmatprep.subr.bf16.mxu0 0
    %568 = vmatpush2.bf16.msra.mxu0 0
    %569 = vmatprep.subr.bf16.mxu0 0
    %570 = vmatpush2.bf16.msra.mxu0 0
    %571 = vmatprep.subr.bf16.mxu0 0
    %572 = vmatpush2.bf16.msra.mxu0 0
    %573 = vmatprep.subr.bf16.mxu0 0
    %574 = vmatpush2.bf16.msra.mxu0 0
    %575 = vmatprep.subr.bf16.mxu0 0
    %576 = vmatpush2.bf16.msra.mxu0 0
    %577 = vmatprep.subr.bf16.mxu0 0
    %578 = vmatpush2.bf16.msra.mxu0 0
    %579 = vmatprep.subr.bf16.mxu0 0
    %580 = vmatpush2.bf16.msra.mxu0 0
    %581 = vmatprep.mubr.bf16.mxu0 0
    %582 = vmatmul.mubr.bf16.gmra.mxu0 %v547
    %v583 = vpop.f32.mrf.mxu0
    %v584 = vadd.f32 0.0, %v583
    %v585 = vpop.f32.mrf.mxu0
    %v586 = vpop.f32.mrf.mxu0
    %v587 = vpop.f32.mrf.mxu0
    %588 = vdwg.mxu0
    %v590 = vrot.slane %v584, 6
    %v592 = vadd.f32 %v147, %v590
    %v593 = vxor.u32 %v592, 2147483648
    %v594 = vmul.f32 %v593, 1.442695
    %v595 = vpow.pop %v594
    %v596 = vadd.f32 %v595, 1.0
    %v597 = vrcp.pop %v596
    %v598 = vmul.f32 1.0, %v597
    %v599 = vtanh.pop %v592
    %v601 = vrot.slane %v535, 6
    %v603 = vmul.f32 %v598, %v601
    %605 = vrot.lane.b32.xlu0 %v599, 64
    %v606 = vpop.permute.xlu0 %605
    %v608 = vmul.f32 %v598, %v606
    %610 = vrot.lane.b32.xlu0 %v608, 32
    %v611 = vpop.permute.xlu0 %610
    %v613 = vadd.f32 %v603, %v611
    %v614 = vtanh.pop %v613
    %616 = vrot.lane.b32.xlu0 %v614, 64
    %v617 = vpop.permute.xlu0 %616
    %v619 = vmul.f32 %v598, %v617
    %v620 = vpack.c.bf16 %v619, %v619
    %v622 = vrot.slane %v620, 1
    %623 = vrot.lane.b32.xlu0 %v622, 32
    %v624 = vpop.permute.xlu0 %623
    %v626 = vsel %vm105, %v624, 0
    %628 = vmatprep.subr.bf16.mxu0 0
    %629 = vmatpush1.bf16.msra.mxu0 0
    %630 = vmatprep.subr.bf16.mxu0 0
    %631 = vmatpush1.bf16.msra.mxu0 0
    %632 = vmatprep.subr.bf16.mxu0 0
    %633 = vmatpush1.bf16.msra.mxu0 0
    %634 = vmatprep.subr.bf16.mxu0 0
    %635 = vmatpush1.bf16.msra.mxu0 0
    %636 = vmatprep.subr.bf16.mxu0 0
    %637 = vmatpush1.bf16.msra.mxu0 0
    %638 = vmatprep.subr.bf16.mxu0 0
    %639 = vmatpush1.bf16.msra.mxu0 0
    %640 = vmatprep.subr.bf16.mxu0 0
    %641 = vmatpush1.bf16.msra.mxu0 %v159
    %642 = vmatprep.subr.bf16.mxu0 0
    %643 = vmatpush1.bf16.msra.mxu0 %v158
    %644 = vmatprep.subr.bf16.mxu0 0
    %645 = vmatpush2.bf16.msra.mxu0 0
    %646 = vmatprep.subr.bf16.mxu0 0
    %647 = vmatpush2.bf16.msra.mxu0 0
    %648 = vmatprep.subr.bf16.mxu0 0
    %649 = vmatpush2.bf16.msra.mxu0 0
    %650 = vmatprep.subr.bf16.mxu0 0
    %651 = vmatpush2.bf16.msra.mxu0 0
    %652 = vmatprep.subr.bf16.mxu0 0
    %653 = vmatpush2.bf16.msra.mxu0 0
    %654 = vmatprep.subr.bf16.mxu0 0
    %655 = vmatpush2.bf16.msra.mxu0 0
    %656 = vmatprep.subr.bf16.mxu0 0
    %657 = vmatpush2.bf16.msra.mxu0 0
    %658 = vmatprep.subr.bf16.mxu0 0
    %659 = vmatpush2.bf16.msra.mxu0 0
    %660 = vmatprep.mubr.bf16.mxu0 0
    %661 = vmatmul.mubr.bf16.gmra.mxu0 %v626
    %v662 = vpop.f32.mrf.mxu0
    %v663 = vadd.f32 0.0, %v662
    %v664 = vpop.f32.mrf.mxu0
    %v665 = vpop.f32.mrf.mxu0
    %v666 = vpop.f32.mrf.mxu0
    %667 = vdwg.mxu0
    %v669 = vrot.slane %v663, 4
    %v671 = vadd.f32 %v147, %v669
    %v672 = vxor.u32 %v671, 2147483648
    %v673 = vmul.f32 %v672, 1.442695
    %v674 = vpow.pop %v673
    %v675 = vadd.f32 %v674, 1.0
    %v676 = vrcp.pop %v675
    %v677 = vmul.f32 1.0, %v676
    %v678 = vtanh.pop %v671
    %v680 = vrot.slane %v613, 6
    %v682 = vmul.f32 %v677, %v680
    %684 = vrot.lane.b32.xlu0 %v678, 64
    %v685 = vpop.permute.xlu0 %684
    %v687 = vmul.f32 %v677, %v685
    %689 = vrot.lane.b32.xlu0 %v687, 32
    %v690 = vpop.permute.xlu0 %689
    %v692 = vadd.f32 %v682, %v690
    %v693 = vtanh.pop %v692
    %695 = vrot.lane.b32.xlu0 %v693, 64
    %v696 = vpop.permute.xlu0 %695
    %v698 = vmul.f32 %v677, %v696
    %v699 = vpack.c.bf16 %v698, %v698
    %v701 = vrot.slane %v699, 2
    %702 = vrot.lane.b32.xlu0 %v701, 32
    %v703 = vpop.permute.xlu0 %702
    %v705 = vsel %vm105, %v703, 0
    %707 = vmatprep.subr.bf16.mxu0 0
    %708 = vmatpush1.bf16.msra.mxu0 0
    %709 = vmatprep.subr.bf16.mxu0 0
    %710 = vmatpush1.bf16.msra.mxu0 0
    %711 = vmatprep.subr.bf16.mxu0 0
    %712 = vmatpush1.bf16.msra.mxu0 0
    %713 = vmatprep.subr.bf16.mxu0 0
    %714 = vmatpush1.bf16.msra.mxu0 0
    %715 = vmatprep.subr.bf16.mxu0 0
    %716 = vmatpush1.bf16.msra.mxu0 0
    %717 = vmatprep.subr.bf16.mxu0 0
    %718 = vmatpush1.bf16.msra.mxu0 0
    %719 = vmatprep.subr.bf16.mxu0 0
    %720 = vmatpush1.bf16.msra.mxu0 %v159
    %721 = vmatprep.subr.bf16.mxu0 0
    %722 = vmatpush1.bf16.msra.mxu0 %v158
    %723 = vmatprep.subr.bf16.mxu0 0
    %724 = vmatpush2.bf16.msra.mxu0 0
    %725 = vmatprep.subr.bf16.mxu0 0
    %726 = vmatpush2.bf16.msra.mxu0 0
    %727 = vmatprep.subr.bf16.mxu0 0
    %728 = vmatpush2.bf16.msra.mxu0 0
    %729 = vmatprep.subr.bf16.mxu0 0
    %730 = vmatpush2.bf16.msra.mxu0 0
    %731 = vmatprep.subr.bf16.mxu0 0
    %732 = vmatpush2.bf16.msra.mxu0 0
    %733 = vmatprep.subr.bf16.mxu0 0
    %734 = vmatpush2.bf16.msra.mxu0 0
    %735 = vmatprep.subr.bf16.mxu0 0
    %736 = vmatpush2.bf16.msra.mxu0 0
    %737 = vmatprep.subr.bf16.mxu0 0
    %738 = vmatpush2.bf16.msra.mxu0 0
    %739 = vmatprep.mubr.bf16.mxu0 0
    %740 = vmatmul.mubr.bf16.gmra.mxu0 %v705
    %v741 = vpop.f32.mrf.mxu0
    %v742 = vadd.f32 0.0, %v741
    %v743 = vpop.f32.mrf.mxu0
    %v744 = vpop.f32.mrf.mxu0
    %v745 = vpop.f32.mrf.mxu0
    %746 = vdwg.mxu0
    %v748 = vrot.slane %v742, 2
    %v750 = vadd.f32 %v147, %v748
    %v751 = vxor.u32 %v750, 2147483648
    %v752 = vmul.f32 %v751, 1.442695
    %v753 = vpow.pop %v752
    %v754 = vadd.f32 %v753, 1.0
    %v755 = vrcp.pop %v754
    %v756 = vmul.f32 1.0, %v755
    %v757 = vtanh.pop %v750
    %v759 = vrot.slane %v692, 6
    %v761 = vmul.f32 %v756, %v759
    %763 = vrot.lane.b32.xlu0 %v757, 64
    %v764 = vpop.permute.xlu0 %763
    %v766 = vmul.f32 %v756, %v764
    %768 = vrot.lane.b32.xlu0 %v766, 32
    %v769 = vpop.permute.xlu0 %768
    %v771 = vadd.f32 %v761, %v769
    %v772 = vtanh.pop %v771
    %774 = vrot.lane.b32.xlu0 %v772, 64
    %v775 = vpop.permute.xlu0 %774
    %v777 = vmul.f32 %v756, %v775
    %vm778 = vcmask 1041408
    %v779 = vsel %vm778, %v229, %v307
    %vm780 = vcmask 1043456
    %v781 = vsel %vm780, %v779, %v386
    %vm782 = vcmask 1045504
    %v783 = vsel %vm782, %v781, %v465
    %v784 = vsel %vm778, %v541, %v619
    %v785 = vsel %vm780, %v784, %v698
    %v786 = vsel %vm782, %v785, %v777
    %v787 = vld [vmem:[#allocation5] sm:$0xf]
    %v788 = vld [vmem:[#allocation5 + $0x4] sm:$0xf]
    %v789 = vld [vmem:[#allocation5 + $0x8] sm:$0xf]
    %v790 = vld [vmem:[#allocation5 + $0xc] sm:$0xf]
    %v791 = vld [vmem:[#allocation7] sm:$0xf]
    %v792 = vld [vmem:[#allocation7 + $0x4] sm:$0xf]
    %v793 = vld [vmem:[#allocation7 + $0x8] sm:$0xf]
    %v794 = vld [vmem:[#allocation7 + $0xc] sm:$0xf]
    %v795 = vld [vmem:[%s6] sm:$0x1]
    %v796 = vpack.c.bf16 %v786, %v783
    %v798 = vlaneseq
    %v799 = vshrl.u32 %v798, 7
    %v800 = vsub.s32 0, %v799
    %v801 = vrot.slane %v795, %v800
    %804 = vrot.lane.b32.xlu0 %v796, 32
    %v805 = vpop.permute.xlu0 %804
    %v810 = vunpack.c.l.b16 %v787
    %v811 = vunpack.c.l.b16 %v788
    %v812 = vunpack.c.l.b16 %v789
    %v813 = vunpack.c.l.b16 %v790
    %v814 = vpack.c.b16 %v811, %v810
    %v815 = vpack.c.b16 %v813, %v812
    %v819 = vsel %vm105, %v805, 0
    %821 = vmatprep.subr.bf16.mxu0 0
    %822 = vmatpush1.bf16.msra.mxu0 0
    %823 = vmatprep.subr.bf16.mxu0 0
    %824 = vmatpush1.bf16.msra.mxu0 0
    %825 = vmatprep.subr.bf16.mxu0 0
    %826 = vmatpush1.bf16.msra.mxu0 0
    %827 = vmatprep.subr.bf16.mxu0 0
    %828 = vmatpush1.bf16.msra.mxu0 0
    %829 = vmatprep.subr.bf16.mxu0 0
    %830 = vmatpush1.bf16.msra.mxu0 0
    %831 = vmatprep.subr.bf16.mxu0 0
    %832 = vmatpush1.bf16.msra.mxu0 0
    %833 = vmatprep.subr.bf16.mxu0 0
    %834 = vmatpush1.bf16.msra.mxu0 %v815
    %835 = vmatprep.subr.bf16.mxu0 0
    %836 = vmatpush1.bf16.msra.mxu0 %v814
    %837 = vmatprep.subr.bf16.mxu0 0
    %838 = vmatpush2.bf16.msra.mxu0 0
    %839 = vmatprep.subr.bf16.mxu0 0
    %840 = vmatpush2.bf16.msra.mxu0 0
    %841 = vmatprep.subr.bf16.mxu0 0
    %842 = vmatpush2.bf16.msra.mxu0 0
    %843 = vmatprep.subr.bf16.mxu0 0
    %844 = vmatpush2.bf16.msra.mxu0 0
    %845 = vmatprep.subr.bf16.mxu0 0
    %846 = vmatpush2.bf16.msra.mxu0 0
    %847 = vmatprep.subr.bf16.mxu0 0
    %848 = vmatpush2.bf16.msra.mxu0 0
    %849 = vmatprep.subr.bf16.mxu0 0
    %850 = vmatpush2.bf16.msra.mxu0 0
    %851 = vmatprep.subr.bf16.mxu0 0
    %852 = vmatpush2.bf16.msra.mxu0 0
    %853 = vmatprep.mubr.bf16.mxu0 0
    %854 = vmatmul.mubr.bf16.gmra.mxu0 %v819
    %v855 = vpop.f32.mrf.mxu0
    %v856 = vadd.f32 %v801, %v855
    %v857 = vpop.f32.mrf.mxu0
    %v858 = vpop.f32.mrf.mxu0
    %v859 = vadd.f32 %v801, %v858
    %v860 = vpop.f32.mrf.mxu0
    %861 = vdwg.mxu0
    %v866 = vunpack.c.l.b16 %v791
    %v867 = vunpack.c.l.b16 %v792
    %v868 = vunpack.c.l.b16 %v793
    %v869 = vunpack.c.l.b16 %v794
    %v870 = vpack.c.b16 %v867, %v866
    %v871 = vpack.c.b16 %v869, %v868
    %874 = vmatprep.subr.bf16.mxu0 0
    %875 = vmatpush1.bf16.msra.mxu0 0
    %876 = vmatprep.subr.bf16.mxu0 0
    %877 = vmatpush1.bf16.msra.mxu0 0
    %878 = vmatprep.subr.bf16.mxu0 0
    %879 = vmatpush1.bf16.msra.mxu0 0
    %880 = vmatprep.subr.bf16.mxu0 0
    %881 = vmatpush1.bf16.msra.mxu0 0
    %882 = vmatprep.subr.bf16.mxu0 0
    %883 = vmatpush1.bf16.msra.mxu0 0
    %884 = vmatprep.subr.bf16.mxu0 0
    %885 = vmatpush1.bf16.msra.mxu0 0
    %886 = vmatprep.subr.bf16.mxu0 0
    %887 = vmatpush1.bf16.msra.mxu0 %v871
    %888 = vmatprep.subr.bf16.mxu0 0
    %889 = vmatpush1.bf16.msra.mxu0 %v870
    %890 = vmatprep.subr.bf16.mxu0 0
    %891 = vmatpush2.bf16.msra.mxu0 0
    %892 = vmatprep.subr.bf16.mxu0 0
    %893 = vmatpush2.bf16.msra.mxu0 0
    %894 = vmatprep.subr.bf16.mxu0 0
    %895 = vmatpush2.bf16.msra.mxu0 0
    %896 = vmatprep.subr.bf16.mxu0 0
    %897 = vmatpush2.bf16.msra.mxu0 0
    %898 = vmatprep.subr.bf16.mxu0 0
    %899 = vmatpush2.bf16.msra.mxu0 0
    %900 = vmatprep.subr.bf16.mxu0 0
    %901 = vmatpush2.bf16.msra.mxu0 0
    %902 = vmatprep.subr.bf16.mxu0 0
    %903 = vmatpush2.bf16.msra.mxu0 0
    %904 = vmatprep.subr.bf16.mxu0 0
    %905 = vmatpush2.bf16.msra.mxu0 0
    %906 = vmatprep.mubr.bf16.mxu0 0
    %907 = vmatmul.mubr.bf16.gmra.mxu0 %v163
    %v908 = vpop.f32.mrf.mxu0
    %v909 = vadd.f32 0.0, %v908
    %v910 = vpop.f32.mrf.mxu0
    %v911 = vpop.f32.mrf.mxu0
    %v912 = vpop.f32.mrf.mxu0
    %913 = vdwg.mxu0
    %v914 = vadd.f32 %v856, %v909
    %v915 = vxor.u32 %v914, 2147483648
    %v916 = vmul.f32 %v915, 1.442695
    %v917 = vpow.pop %v916
    %v918 = vadd.f32 %v917, 1.0
    %v919 = vrcp.pop %v918
    %v920 = vmul.f32 1.0, %v919
    %v921 = vtanh.pop %v914
    %v922 = vmul.f32 %v920, 0.0
    %924 = vrot.lane.b32.xlu0 %v921, 64
    %v925 = vpop.permute.xlu0 %924
    %v927 = vmul.f32 %v920, %v925
    %929 = vrot.lane.b32.xlu0 %v927, 32
    %v930 = vpop.permute.xlu0 %929
    %v932 = vadd.f32 %v922, %v930
    %v933 = vtanh.pop %v932
    %935 = vrot.lane.b32.xlu0 %v933, 64
    %v936 = vpop.permute.xlu0 %935
    %v938 = vmul.f32 %v920, %v936
    %v939 = vpack.c.bf16 %v938, %v938
    %941 = vrot.lane.b32.xlu0 %v939, 32
    %v942 = vpop.permute.xlu0 %941
    %v944 = vsel %vm105, %v942, 0
    %946 = vmatprep.subr.bf16.mxu0 0
    %947 = vmatpush1.bf16.msra.mxu0 0
    %948 = vmatprep.subr.bf16.mxu0 0
    %949 = vmatpush1.bf16.msra.mxu0 0
    %950 = vmatprep.subr.bf16.mxu0 0
    %951 = vmatpush1.bf16.msra.mxu0 0
    %952 = vmatprep.subr.bf16.mxu0 0
    %953 = vmatpush1.bf16.msra.mxu0 0
    %954 = vmatprep.subr.bf16.mxu0 0
    %955 = vmatpush1.bf16.msra.mxu0 0
    %956 = vmatprep.subr.bf16.mxu0 0
    %957 = vmatpush1.bf16.msra.mxu0 0
    %958 = vmatprep.subr.bf16.mxu0 0
    %959 = vmatpush1.bf16.msra.mxu0 %v871
    %960 = vmatprep.subr.bf16.mxu0 0
    %961 = vmatpush1.bf16.msra.mxu0 %v870
    %962 = vmatprep.subr.bf16.mxu0 0
    %963 = vmatpush2.bf16.msra.mxu0 0
    %964 = vmatprep.subr.bf16.mxu0 0
    %965 = vmatpush2.bf16.msra.mxu0 0
    %966 = vmatprep.subr.bf16.mxu0 0
    %967 = vmatpush2.bf16.msra.mxu0 0
    %968 = vmatprep.subr.bf16.mxu0 0
    %969 = vmatpush2.bf16.msra.mxu0 0
    %970 = vmatprep.subr.bf16.mxu0 0
    %971 = vmatpush2.bf16.msra.mxu0 0
    %972 = vmatprep.subr.bf16.mxu0 0
    %973 = vmatpush2.bf16.msra.mxu0 0
    %974 = vmatprep.subr.bf16.mxu0 0
    %975 = vmatpush2.bf16.msra.mxu0 0
    %976 = vmatprep.subr.bf16.mxu0 0
    %977 = vmatpush2.bf16.msra.mxu0 0
    %978 = vmatprep.mubr.bf16.mxu0 0
    %979 = vmatmul.mubr.bf16.gmra.mxu0 %v944
    %v980 = vpop.f32.mrf.mxu0
    %v981 = vadd.f32 0.0, %v980
    %v982 = vpop.f32.mrf.mxu0
    %v983 = vpop.f32.mrf.mxu0
    %v984 = vpop.f32.mrf.mxu0
    %985 = vdwg.mxu0
    %v987 = vrot.slane %v981, 6
    %v989 = vadd.f32 %v856, %v987
    %v990 = vxor.u32 %v989, 2147483648
    %v991 = vmul.f32 %v990, 1.442695
    %v992 = vpow.pop %v991
    %v993 = vadd.f32 %v992, 1.0
    %v994 = vrcp.pop %v993
    %v995 = vmul.f32 1.0, %v994
    %v996 = vtanh.pop %v989
    %v998 = vrot.slane %v932, 6
    %v1000 = vmul.f32 %v995, %v998
    %1002 = vrot.lane.b32.xlu0 %v996, 64
    %v1003 = vpop.permute.xlu0 %1002
    %v1005 = vmul.f32 %v995, %v1003
    %1007 = vrot.lane.b32.xlu0 %v1005, 32
    %v1008 = vpop.permute.xlu0 %1007
    %v1010 = vadd.f32 %v1000, %v1008
    %v1011 = vtanh.pop %v1010
    %1013 = vrot.lane.b32.xlu0 %v1011, 64
    %v1014 = vpop.permute.xlu0 %1013
    %v1016 = vmul.f32 %v995, %v1014
    %v1017 = vpack.c.bf16 %v1016, %v1016
    %v1019 = vrot.slane %v1017, 1
    %1020 = vrot.lane.b32.xlu0 %v1019, 32
    %v1021 = vpop.permute.xlu0 %1020
    %v1023 = vsel %vm105, %v1021, 0
    %1025 = vmatprep.subr.bf16.mxu0 0
    %1026 = vmatpush1.bf16.msra.mxu0 0
    %1027 = vmatprep.subr.bf16.mxu0 0
    %1028 = vmatpush1.bf16.msra.mxu0 0
    %1029 = vmatprep.subr.bf16.mxu0 0
    %1030 = vmatpush1.bf16.msra.mxu0 0
    %1031 = vmatprep.subr.bf16.mxu0 0
    %1032 = vmatpush1.bf16.msra.mxu0 0
    %1033 = vmatprep.subr.bf16.mxu0 0
    %1034 = vmatpush1.bf16.msra.mxu0 0
    %1035 = vmatprep.subr.bf16.mxu0 0
    %1036 = vmatpush1.bf16.msra.mxu0 0
    %1037 = vmatprep.subr.bf16.mxu0 0
    %1038 = vmatpush1.bf16.msra.mxu0 %v871
    %1039 = vmatprep.subr.bf16.mxu0 0
    %1040 = vmatpush1.bf16.msra.mxu0 %v870
    %1041 = vmatprep.subr.bf16.mxu0 0
    %1042 = vmatpush2.bf16.msra.mxu0 0
    %1043 = vmatprep.subr.bf16.mxu0 0
    %1044 = vmatpush2.bf16.msra.mxu0 0
    %1045 = vmatprep.subr.bf16.mxu0 0
    %1046 = vmatpush2.bf16.msra.mxu0 0
    %1047 = vmatprep.subr.bf16.mxu0 0
    %1048 = vmatpush2.bf16.msra.mxu0 0
    %1049 = vmatprep.subr.bf16.mxu0 0
    %1050 = vmatpush2.bf16.msra.mxu0 0
    %1051 = vmatprep.subr.bf16.mxu0 0
    %1052 = vmatpush2.bf16.msra.mxu0 0
    %1053 = vmatprep.subr.bf16.mxu0 0
    %1054 = vmatpush2.bf16.msra.mxu0 0
    %1055 = vmatprep.subr.bf16.mxu0 0
    %1056 = vmatpush2.bf16.msra.mxu0 0
    %1057 = vmatprep.mubr.bf16.mxu0 0
    %1058 = vmatmul.mubr.bf16.gmra.mxu0 %v1023
    %v1059 = vpop.f32.mrf.mxu0
    %v1060 = vadd.f32 0.0, %v1059
    %v1061 = vpop.f32.mrf.mxu0
    %v1062 = vpop.f32.mrf.mxu0
    %v1063 = vpop.f32.mrf.mxu0
    %1064 = vdwg.mxu0
    %v1066 = vrot.slane %v1060, 4
    %v1068 = vadd.f32 %v856, %v1066
    %v1069 = vxor.u32 %v1068, 2147483648
    %v1070 = vmul.f32 %v1069, 1.442695
    %v1071 = vpow.pop %v1070
    %v1072 = vadd.f32 %v1071, 1.0
    %v1073 = vrcp.pop %v1072
    %v1074 = vmul.f32 1.0, %v1073
    %v1075 = vtanh.pop %v1068
    %v1077 = vrot.slane %v1010, 6
    %v1079 = vmul.f32 %v1074, %v1077
    %1081 = vrot.lane.b32.xlu0 %v1075, 64
    %v1082 = vpop.permute.xlu0 %1081
    %v1084 = vmul.f32 %v1074, %v1082
    %1086 = vrot.lane.b32.xlu0 %v1084, 32
    %v1087 = vpop.permute.xlu0 %1086
    %v1089 = vadd.f32 %v1079, %v1087
    %v1090 = vtanh.pop %v1089
    %1092 = vrot.lane.b32.xlu0 %v1090, 64
    %v1093 = vpop.permute.xlu0 %1092
    %v1095 = vmul.f32 %v1074, %v1093
    %v1096 = vpack.c.bf16 %v1095, %v1095
    %v1098 = vrot.slane %v1096, 2
    %1099 = vrot.lane.b32.xlu0 %v1098, 32
    %v1100 = vpop.permute.xlu0 %1099
    %v1102 = vsel %vm105, %v1100, 0
    %1104 = vmatprep.subr.bf16.mxu0 0
    %1105 = vmatpush1.bf16.msra.mxu0 0
    %1106 = vmatprep.subr.bf16.mxu0 0
    %1107 = vmatpush1.bf16.msra.mxu0 0
    %1108 = vmatprep.subr.bf16.mxu0 0
    %1109 = vmatpush1.bf16.msra.mxu0 0
    %1110 = vmatprep.subr.bf16.mxu0 0
    %1111 = vmatpush1.bf16.msra.mxu0 0
    %1112 = vmatprep.subr.bf16.mxu0 0
    %1113 = vmatpush1.bf16.msra.mxu0 0
    %1114 = vmatprep.subr.bf16.mxu0 0
    %1115 = vmatpush1.bf16.msra.mxu0 0
    %1116 = vmatprep.subr.bf16.mxu0 0
    %1117 = vmatpush1.bf16.msra.mxu0 %v871
    %1118 = vmatprep.subr.bf16.mxu0 0
    %1119 = vmatpush1.bf16.msra.mxu0 %v870
    %1120 = vmatprep.subr.bf16.mxu0 0
    %1121 = vmatpush2.bf16.msra.mxu0 0
    %1122 = vmatprep.subr.bf16.mxu0 0
    %1123 = vmatpush2.bf16.msra.mxu0 0
    %1124 = vmatprep.subr.bf16.mxu0 0
    %1125 = vmatpush2.bf16.msra.mxu0 0
    %1126 = vmatprep.subr.bf16.mxu0 0
    %1127 = vmatpush2.bf16.msra.mxu0 0
    %1128 = vmatprep.subr.bf16.mxu0 0
    %1129 = vmatpush2.bf16.msra.mxu0 0
    %1130 = vmatprep.subr.bf16.mxu0 0
    %1131 = vmatpush2.bf16.msra.mxu0 0
    %1132 = vmatprep.subr.bf16.mxu0 0
    %1133 = vmatpush2.bf16.msra.mxu0 0
    %1134 = vmatprep.subr.bf16.mxu0 0
    %1135 = vmatpush2.bf16.msra.mxu0 0
    %1136 = vmatprep.mubr.bf16.mxu0 0
    %1137 = vmatmul.mubr.bf16.gmra.mxu0 %v1102
    %v1138 = vpop.f32.mrf.mxu0
    %v1139 = vadd.f32 0.0, %v1138
    %v1140 = vpop.f32.mrf.mxu0
    %v1141 = vpop.f32.mrf.mxu0
    %v1142 = vpop.f32.mrf.mxu0
    %1143 = vdwg.mxu0
    %v1145 = vrot.slane %v1139, 2
    %v1147 = vadd.f32 %v856, %v1145
    %v1148 = vxor.u32 %v1147, 2147483648
    %v1149 = vmul.f32 %v1148, 1.442695
    %v1150 = vpow.pop %v1149
    %v1151 = vadd.f32 %v1150, 1.0
    %v1152 = vrcp.pop %v1151
    %v1153 = vmul.f32 1.0, %v1152
    %v1154 = vtanh.pop %v1147
    %v1156 = vrot.slane %v1089, 6
    %v1158 = vmul.f32 %v1153, %v1156
    %1160 = vrot.lane.b32.xlu0 %v1154, 64
    %v1161 = vpop.permute.xlu0 %1160
    %v1163 = vmul.f32 %v1153, %v1161
    %1165 = vrot.lane.b32.xlu0 %v1163, 32
    %v1166 = vpop.permute.xlu0 %1165
    %v1168 = vadd.f32 %v1158, %v1166
    %v1169 = vtanh.pop %v1168
    %1171 = vrot.lane.b32.xlu0 %v1169, 64
    %v1172 = vpop.permute.xlu0 %1171
    %v1174 = vmul.f32 %v1153, %v1172
    %v1175 = vpack.c.bf16 %v1174, %v1174
    %v1177 = vrot.slane %v1175, 3
    %1178 = vrot.lane.b32.xlu0 %v1177, 32
    %v1179 = vpop.permute.xlu0 %1178
    %v1181 = vsel %vm105, %v1179, 0
    %1183 = vmatprep.subr.bf16.mxu0 0
    %1184 = vmatpush1.bf16.msra.mxu0 0
    %1185 = vmatprep.subr.bf16.mxu0 0
    %1186 = vmatpush1.bf16.msra.mxu0 0
    %1187 = vmatprep.subr.bf16.mxu0 0
    %1188 = vmatpush1.bf16.msra.mxu0 0
    %1189 = vmatprep.subr.bf16.mxu0 0
    %1190 = vmatpush1.bf16.msra.mxu0 0
    %1191 = vmatprep.subr.bf16.mxu0 0
    %1192 = vmatpush1.bf16.msra.mxu0 0
    %1193 = vmatprep.subr.bf16.mxu0 0
    %1194 = vmatpush1.bf16.msra.mxu0 0
    %1195 = vmatprep.subr.bf16.mxu0 0
    %1196 = vmatpush1.bf16.msra.mxu0 %v871
    %1197 = vmatprep.subr.bf16.mxu0 0
    %1198 = vmatpush1.bf16.msra.mxu0 %v870
    %1199 = vmatprep.subr.bf16.mxu0 0
    %1200 = vmatpush2.bf16.msra.mxu0 0
    %1201 = vmatprep.subr.bf16.mxu0 0
    %1202 = vmatpush2.bf16.msra.mxu0 0
    %1203 = vmatprep.subr.bf16.mxu0 0
    %1204 = vmatpush2.bf16.msra.mxu0 0
    %1205 = vmatprep.subr.bf16.mxu0 0
    %1206 = vmatpush2.bf16.msra.mxu0 0
    %1207 = vmatprep.subr.bf16.mxu0 0
    %1208 = vmatpush2.bf16.msra.mxu0 0
    %1209 = vmatprep.subr.bf16.mxu0 0
    %1210 = vmatpush2.bf16.msra.mxu0 0
    %1211 = vmatprep.subr.bf16.mxu0 0
    %1212 = vmatpush2.bf16.msra.mxu0 0
    %1213 = vmatprep.subr.bf16.mxu0 0
    %1214 = vmatpush2.bf16.msra.mxu0 0
    %1215 = vmatprep.mubr.bf16.mxu0 0
    %1216 = vmatmul.mubr.bf16.gmra.mxu0 %v1181
    %v1217 = vpop.f32.mrf.mxu0
    %v1218 = vadd.f32 0.0, %v1217
    %v1219 = vpop.f32.mrf.mxu0
    %v1220 = vpop.f32.mrf.mxu0
    %v1221 = vpop.f32.mrf.mxu0
    %1222 = vdwg.mxu0
    %v1223 = vadd.f32 %v859, %v1218
    %v1224 = vxor.u32 %v1223, 2147483648
    %v1225 = vmul.f32 %v1224, 1.442695
    %v1226 = vpow.pop %v1225
    %v1227 = vadd.f32 %v1226, 1.0
    %v1228 = vrcp.pop %v1227
    %v1229 = vmul.f32 1.0, %v1228
    %v1230 = vtanh.pop %v1223
    %v1232 = vrot.slane %v1168, 6
    %v1234 = vmul.f32 %v1229, %v1232
    %1236 = vrot.lane.b32.xlu0 %v1230, 64
    %v1237 = vpop.permute.xlu0 %1236
    %v1239 = vmul.f32 %v1229, %v1237
    %1241 = vrot.lane.b32.xlu0 %v1239, 32
    %v1242 = vpop.permute.xlu0 %1241
    %v1244 = vadd.f32 %v1234, %v1242
    %v1245 = vtanh.pop %v1244
    %1247 = vrot.lane.b32.xlu0 %v1245, 64
    %v1248 = vpop.permute.xlu0 %1247
    %v1250 = vmul.f32 %v1229, %v1248
    %v1251 = vpack.c.bf16 %v1250, %v1250
    %1253 = vrot.lane.b32.xlu0 %v1251, 32
    %v1254 = vpop.permute.xlu0 %1253
    %v1256 = vsel %vm105, %v1254, 0
    %1258 = vmatprep.subr.bf16.mxu0 0
    %1259 = vmatpush1.bf16.msra.mxu0 0
    %1260 = vmatprep.subr.bf16.mxu0 0
    %1261 = vmatpush1.bf16.msra.mxu0 0
    %1262 = vmatprep.subr.bf16.mxu0 0
    %1263 = vmatpush1.bf16.msra.mxu0 0
    %1264 = vmatprep.subr.bf16.mxu0 0
    %1265 = vmatpush1.bf16.msra.mxu0 0
    %1266 = vmatprep.subr.bf16.mxu0 0
    %1267 = vmatpush1.bf16.msra.mxu0 0
    %1268 = vmatprep.subr.bf16.mxu0 0
    %1269 = vmatpush1.bf16.msra.mxu0 0
    %1270 = vmatprep.subr.bf16.mxu0 0
    %1271 = vmatpush1.bf16.msra.mxu0 %v871
    %1272 = vmatprep.subr.bf16.mxu0 0
    %1273 = vmatpush1.bf16.msra.mxu0 %v870
    %1274 = vmatprep.subr.bf16.mxu0 0
    %1275 = vmatpush2.bf16.msra.mxu0 0
    %1276 = vmatprep.subr.bf16.mxu0 0
    %1277 = vmatpush2.bf16.msra.mxu0 0
    %1278 = vmatprep.subr.bf16.mxu0 0
    %1279 = vmatpush2.bf16.msra.mxu0 0
    %1280 = vmatprep.subr.bf16.mxu0 0
    %1281 = vmatpush2.bf16.msra.mxu0 0
    %1282 = vmatprep.subr.bf16.mxu0 0
    %1283 = vmatpush2.bf16.msra.mxu0 0
    %1284 = vmatprep.subr.bf16.mxu0 0
    %1285 = vmatpush2.bf16.msra.mxu0 0
    %1286 = vmatprep.subr.bf16.mxu0 0
    %1287 = vmatpush2.bf16.msra.mxu0 0
    %1288 = vmatprep.subr.bf16.mxu0 0
    %1289 = vmatpush2.bf16.msra.mxu0 0
    %1290 = vmatprep.mubr.bf16.mxu0 0
    %1291 = vmatmul.mubr.bf16.gmra.mxu0 %v1256
    %v1292 = vpop.f32.mrf.mxu0
    %v1293 = vadd.f32 0.0, %v1292
    %v1294 = vpop.f32.mrf.mxu0
    %v1295 = vpop.f32.mrf.mxu0
    %v1296 = vpop.f32.mrf.mxu0
    %1297 = vdwg.mxu0
    %v1299 = vrot.slane %v1293, 6
    %v1301 = vadd.f32 %v859, %v1299
    %v1302 = vxor.u32 %v1301, 2147483648
    %v1303 = vmul.f32 %v1302, 1.442695
    %v1304 = vpow.pop %v1303
    %v1305 = vadd.f32 %v1304, 1.0
    %v1306 = vrcp.pop %v1305
    %v1307 = vmul.f32 1.0, %v1306
    %v1308 = vtanh.pop %v1301
    %v1310 = vrot.slane %v1244, 6
    %v1312 = vmul.f32 %v1307, %v1310
    %1314 = vrot.lane.b32.xlu0 %v1308, 64
    %v1315 = vpop.permute.xlu0 %1314
    %v1317 = vmul.f32 %v1307, %v1315
    %1319 = vrot.lane.b32.xlu0 %v1317, 32
    %v1320 = vpop.permute.xlu0 %1319
    %v1322 = vadd.f32 %v1312, %v1320
    %v1323 = vtanh.pop %v1322
    %1325 = vrot.lane.b32.xlu0 %v1323, 64
    %v1326 = vpop.permute.xlu0 %1325
    %v1328 = vmul.f32 %v1307, %v1326
    %v1329 = vpack.c.bf16 %v1328, %v1328
    %v1331 = vrot.slane %v1329, 1
    %1332 = vrot.lane.b32.xlu0 %v1331, 32
    %v1333 = vpop.permute.xlu0 %1332
    %v1335 = vsel %vm105, %v1333, 0
    %1337 = vmatprep.subr.bf16.mxu0 0
    %1338 = vmatpush1.bf16.msra.mxu0 0
    %1339 = vmatprep.subr.bf16.mxu0 0
    %1340 = vmatpush1.bf16.msra.mxu0 0
    %1341 = vmatprep.subr.bf16.mxu0 0
    %1342 = vmatpush1.bf16.msra.mxu0 0
    %1343 = vmatprep.subr.bf16.mxu0 0
    %1344 = vmatpush1.bf16.msra.mxu0 0
    %1345 = vmatprep.subr.bf16.mxu0 0
    %1346 = vmatpush1.bf16.msra.mxu0 0
    %1347 = vmatprep.subr.bf16.mxu0 0
    %1348 = vmatpush1.bf16.msra.mxu0 0
    %1349 = vmatprep.subr.bf16.mxu0 0
    %1350 = vmatpush1.bf16.msra.mxu0 %v871
    %1351 = vmatprep.subr.bf16.mxu0 0
    %1352 = vmatpush1.bf16.msra.mxu0 %v870
    %1353 = vmatprep.subr.bf16.mxu0 0
    %1354 = vmatpush2.bf16.msra.mxu0 0
    %1355 = vmatprep.subr.bf16.mxu0 0
    %1356 = vmatpush2.bf16.msra.mxu0 0
    %1357 = vmatprep.subr.bf16.mxu0 0
    %1358 = vmatpush2.bf16.msra.mxu0 0
    %1359 = vmatprep.subr.bf16.mxu0 0
    %1360 = vmatpush2.bf16.msra.mxu0 0
    %1361 = vmatprep.subr.bf16.mxu0 0
    %1362 = vmatpush2.bf16.msra.mxu0 0
    %1363 = vmatprep.subr.bf16.mxu0 0
    %1364 = vmatpush2.bf16.msra.mxu0 0
    %1365 = vmatprep.subr.bf16.mxu0 0
    %1366 = vmatpush2.bf16.msra.mxu0 0
    %1367 = vmatprep.subr.bf16.mxu0 0
    %1368 = vmatpush2.bf16.msra.mxu0 0
    %1369 = vmatprep.mubr.bf16.mxu0 0
    %1370 = vmatmul.mubr.bf16.gmra.mxu0 %v1335
    %v1371 = vpop.f32.mrf.mxu0
    %v1372 = vadd.f32 0.0, %v1371
    %v1373 = vpop.f32.mrf.mxu0
    %v1374 = vpop.f32.mrf.mxu0
    %v1375 = vpop.f32.mrf.mxu0
    %1376 = vdwg.mxu0
    %v1378 = vrot.slane %v1372, 4
    %v1380 = vadd.f32 %v859, %v1378
    %v1381 = vxor.u32 %v1380, 2147483648
    %v1382 = vmul.f32 %v1381, 1.442695
    %v1383 = vpow.pop %v1382
    %v1384 = vadd.f32 %v1383, 1.0
    %v1385 = vrcp.pop %v1384
    %v1386 = vmul.f32 1.0, %v1385
    %v1387 = vtanh.pop %v1380
    %v1389 = vrot.slane %v1322, 6
    %v1391 = vmul.f32 %v1386, %v1389
    %1393 = vrot.lane.b32.xlu0 %v1387, 64
    %v1394 = vpop.permute.xlu0 %1393
    %v1396 = vmul.f32 %v1386, %v1394
    %1398 = vrot.lane.b32.xlu0 %v1396, 32
    %v1399 = vpop.permute.xlu0 %1398
    %v1401 = vadd.f32 %v1391, %v1399
    %v1402 = vtanh.pop %v1401
    %1404 = vrot.lane.b32.xlu0 %v1402, 64
    %v1405 = vpop.permute.xlu0 %1404
    %v1407 = vmul.f32 %v1386, %v1405
    %v1408 = vpack.c.bf16 %v1407, %v1407
    %v1410 = vrot.slane %v1408, 2
    %1411 = vrot.lane.b32.xlu0 %v1410, 32
    %v1412 = vpop.permute.xlu0 %1411
    %v1414 = vsel %vm105, %v1412, 0
    %1416 = vmatprep.subr.bf16.mxu0 0
    %1417 = vmatpush1.bf16.msra.mxu0 0
    %1418 = vmatprep.subr.bf16.mxu0 0
    %1419 = vmatpush1.bf16.msra.mxu0 0
    %1420 = vmatprep.subr.bf16.mxu0 0
    %1421 = vmatpush1.bf16.msra.mxu0 0
    %1422 = vmatprep.subr.bf16.mxu0 0
    %1423 = vmatpush1.bf16.msra.mxu0 0
    %1424 = vmatprep.subr.bf16.mxu0 0
    %1425 = vmatpush1.bf16.msra.mxu0 0
    %1426 = vmatprep.subr.bf16.mxu0 0
    %1427 = vmatpush1.bf16.msra.mxu0 0
    %1428 = vmatprep.subr.bf16.mxu0 0
    %1429 = vmatpush1.bf16.msra.mxu0 %v871
    %1430 = vmatprep.subr.bf16.mxu0 0
    %1431 = vmatpush1.bf16.msra.mxu0 %v870
    %1432 = vmatprep.subr.bf16.mxu0 0
    %1433 = vmatpush2.bf16.msra.mxu0 0
    %1434 = vmatprep.subr.bf16.mxu0 0
    %1435 = vmatpush2.bf16.msra.mxu0 0
    %1436 = vmatprep.subr.bf16.mxu0 0
    %1437 = vmatpush2.bf16.msra.mxu0 0
    %1438 = vmatprep.subr.bf16.mxu0 0
    %1439 = vmatpush2.bf16.msra.mxu0 0
    %1440 = vmatprep.subr.bf16.mxu0 0
    %1441 = vmatpush2.bf16.msra.mxu0 0
    %1442 = vmatprep.subr.bf16.mxu0 0
    %1443 = vmatpush2.bf16.msra.mxu0 0
    %1444 = vmatprep.subr.bf16.mxu0 0
    %1445 = vmatpush2.bf16.msra.mxu0 0
    %1446 = vmatprep.subr.bf16.mxu0 0
    %1447 = vmatpush2.bf16.msra.mxu0 0
    %1448 = vmatprep.mubr.bf16.mxu0 0
    %1449 = vmatmul.mubr.bf16.gmra.mxu0 %v1414
    %v1450 = vpop.f32.mrf.mxu0
    %v1451 = vadd.f32 0.0, %v1450
    %v1452 = vpop.f32.mrf.mxu0
    %v1453 = vpop.f32.mrf.mxu0
    %v1454 = vpop.f32.mrf.mxu0
    %1455 = vdwg.mxu0
    %v1457 = vrot.slane %v1451, 2
    %v1459 = vadd.f32 %v859, %v1457
    %v1460 = vxor.u32 %v1459, 2147483648
    %v1461 = vmul.f32 %v1460, 1.442695
    %v1462 = vpow.pop %v1461
    %v1463 = vadd.f32 %v1462, 1.0
    %v1464 = vrcp.pop %v1463
    %v1465 = vmul.f32 1.0, %v1464
    %v1466 = vtanh.pop %v1459
    %v1468 = vrot.slane %v1401, 6
    %v1470 = vmul.f32 %v1465, %v1468
    %1472 = vrot.lane.b32.xlu0 %v1466, 64
    %v1473 = vpop.permute.xlu0 %1472
    %v1475 = vmul.f32 %v1465, %v1473
    %1477 = vrot.lane.b32.xlu0 %v1475, 32
    %v1478 = vpop.permute.xlu0 %1477
    %v1480 = vadd.f32 %v1470, %v1478
    %v1481 = vtanh.pop %v1480
    %1483 = vrot.lane.b32.xlu0 %v1481, 64
    %v1484 = vpop.permute.xlu0 %1483
    %v1486 = vmul.f32 %v1465, %v1484
    %v1487 = vld [vmem:[%s7] sm:$0xff]
    %v1488 = vld [vmem:[%s7 + $0x8] sm:$0xff]
    %v1489 = vld [vmem:[%s7 + $0x10] sm:$0xff]
    %v1490 = vld [vmem:[%s7 + $0x18] sm:$0xff]
    %v1491 = vld [vmem:[%s8] sm:$0x1]
    %v1493 = vlaneseq
    %v1494 = vshrl.u32 %v1493, 7
    %v1495 = vsub.s32 0, %v1494
    %v1496 = vrot.slane %v1491, %v1495
    %v1499 = vrot.slane %v1486, 6
    %1500 = vrot.lane.b32.xlu0 %v1499, 32
    %v1501 = vpop.permute.xlu0 %1500
    %v1502 = vsel %vm105, %v1501, 0
    %1504 = vmatprep.subr.mxu0 0.0
    %1505 = vmatpush1.msra.mxu0 0.0
    %1506 = vmatprep.subr.mxu0 0.0
    %1507 = vmatpush1.msra.mxu0 0.0
    %1508 = vmatprep.subr.mxu0 0.0
    %1509 = vmatpush1.msra.mxu0 0.0
    %1510 = vmatprep.subr.mxu0 0.0
    %1511 = vmatpush1.msra.mxu0 0.0
    %1512 = vmatprep.subr.mxu0 0.0
    %1513 = vmatpush1.msra.mxu0 0.0
    %1514 = vmatprep.subr.mxu0 0.0
    %1515 = vmatpush1.msra.mxu0 0.0
    %1516 = vmatprep.subr.mxu0 0.0
    %1517 = vmatpush1.msra.mxu0 0.0
    %1518 = vmatprep.subr.mxu0 0.0
    %1519 = vmatpush1.msra.mxu0 0.0
    %1520 = vmatprep.subr.mxu0 0.0
    %1521 = vmatpush1.msra.mxu0 0.0
    %1522 = vmatprep.subr.mxu0 0.0
    %1523 = vmatpush1.msra.mxu0 0.0
    %1524 = vmatprep.subr.mxu0 0.0
    %1525 = vmatpush1.msra.mxu0 0.0
    %1526 = vmatprep.subr.mxu0 0.0
    %1527 = vmatpush1.msra.mxu0 0.0
    %1528 = vmatprep.subr.mxu0 0.0
    %1529 = vmatpush1.msra.mxu0 %v1490
    %1530 = vmatprep.subr.mxu0 0.0
    %1531 = vmatpush1.msra.mxu0 %v1489
    %1532 = vmatprep.subr.mxu0 0.0
    %1533 = vmatpush1.msra.mxu0 %v1488
    %1534 = vmatprep.subr.mxu0 0.0
    %1535 = vmatpush1.msra.mxu0 %v1487
    %1536 = vmatprep.subr.mxu0 0.0
    %1537 = vmatpush2.msra.mxu0 0.0
    %1538 = vmatprep.subr.mxu0 0.0
    %1539 = vmatpush2.msra.mxu0 0.0
    %1540 = vmatprep.subr.mxu0 0.0
    %1541 = vmatpush2.msra.mxu0 0.0
    %1542 = vmatprep.subr.mxu0 0.0
    %1543 = vmatpush2.msra.mxu0 0.0
    %1544 = vmatprep.subr.mxu0 0.0
    %1545 = vmatpush2.msra.mxu0 0.0
    %1546 = vmatprep.subr.mxu0 0.0
    %1547 = vmatpush2.msra.mxu0 0.0
    %1548 = vmatprep.subr.mxu0 0.0
    %1549 = vmatpush2.msra.mxu0 0.0
    %1550 = vmatprep.subr.mxu0 0.0
    %1551 = vmatpush2.msra.mxu0 0.0
    %1552 = vmatprep.subr.mxu0 0.0
    %1553 = vmatpush2.msra.mxu0 0.0
    %1554 = vmatprep.subr.mxu0 0.0
    %1555 = vmatpush2.msra.mxu0 0.0
    %1556 = vmatprep.subr.mxu0 0.0
    %1557 = vmatpush2.msra.mxu0 0.0
    %1558 = vmatprep.subr.mxu0 0.0
    %1559 = vmatpush2.msra.mxu0 0.0
    %1560 = vmatprep.subr.mxu0 0.0
    %1561 = vmatpush2.msra.mxu0 0.0
    %1562 = vmatprep.subr.mxu0 0.0
    %1563 = vmatpush2.msra.mxu0 0.0
    %1564 = vmatprep.subr.mxu0 0.0
    %1565 = vmatpush2.msra.mxu0 0.0
    %1566 = vmatprep.subr.mxu0 0.0
    %1567 = vmatpush2.msra.mxu0 0.0
    %1568 = vmatprep.mubr.f32.mxu0 0.0
    %1569 = vmatmul.mubr.f32.gmra.mxu0 %v1502
    %v1570 = vpop.f32.mrf.mxu0
    %v1571 = vadd.f32 %v1496, %v1570
    %v1572 = vpop.f32.mrf.mxu0
    %1573 = vdwg.mxu0
    %vm1574 = vcmask 25600
    %1575 = vst.msk [vmem:[#allocation8] sm:$0x3] %vm1574, %v1571
    // Predicated region
    $region50: #{tpu_custom_call.1} parent=1 // pred_check
      _
    $region51: #{tpu_custom_call.1} parent=1 // pred_check_branch
      %1577 = sbr.rel (0) target = $region53
    $region52: #{tpu_custom_call.1} parent=1 // pred_region
      %s1579 = ssub.s32 32, 32
      %1580 = vsyncadd [#allocation4], %s1579
      %s1582 = sshll.u32 [#allocation8], 4
      %s1583 = int_to_ptr.vmem [resolvable:$true] %s1582
      %1585 = dma.vmem_to_hbm [thread:$0]  %s1583, 32, %s9, [#allocation4]
    $region53: #{tpu_custom_call.1} parent=1 // pred_fallthru
      _
    // Predicated region
    $region54: #{tpu_custom_call.1} parent=1 // pred_check
      _
    $region55: #{tpu_custom_call.1} parent=1 // pred_check_branch
      %1587 = sbr.rel (0) target = $region57
    $region56: #{tpu_custom_call.1} parent=1 // pred_region
      %1588 = dma.done [#allocation4], 32
    $region57: #{tpu_custom_call.1} parent=1 // pred_fallthru
      _
    %1589 = vsyncpa [#allocation3], 1
    %1590 = vsyncpa [#allocation6], 1
    %1591 = vsyncpa [#allocation4], 1

</llo_original>
